<compile_context>
chip_gen: v6e
topology: v6e:2x2x1
jax: 0.10.0
libtpu: 0.0.40
codegen_flags: <defaults>
</compile_context>

<pallas_src>
import math
from functools import partial

import jax
import jax.numpy as jnp
from jax import lax
from jax.experimental import pallas as pl
from jax.experimental.pallas import tpu as pltpu


def _mm(w, x):
    """(Cout, Cin) @ (Cin, L) -> (Cout, L); bf16 operands, f32 accumulation."""
    return lax.dot_general(
        w, x, (((1,), (0,)), ((), ())), preferred_element_type=jnp.float32)


def basic_transformer2_kernel(
    xk_ref, xq_ref, xv_ref,                  # (C, L) input blocks (f32), L = b_blk*N
    bn_s_ref, bn_b_ref,                      # (4, C, 1) folded BN scale/shift (key,query,value,head)
    w1_ref, b1_ref, w2_ref, b2_ref,          # (4, L, L) bf16 block-diag TM weights, (4, 1, L) f32 biases
    qw_ref, qb_ref,                          # (C8, C) bf16, (C8, 1) f32   query_conv
    kw_ref, kb_ref,                          # (C8, C) bf16, (C8, 1) f32   key_conv
    vw_ref, vb_ref,                          # (C,  C) bf16, (C,  1) f32   value_conv
    m1a_ref, m1b_ref, m1bias_ref,            # (C, C) bf16 x2, (C, 1) f32  merge1 split halves
    m2a_ref, m2b_ref, m2bias_ref,            # (C, C) bf16 x2, (C, 1) f32  merge2 split halves
    out_ref,                                 # (C, L) f32 output block
    v_buf_ref,                               # (C, L) bf16 VMEM scratch for V
    *, n_spatial,
):
    f32, bf16 = jnp.float32, jnp.bfloat16
    C, L = xk_ref.shape
    N = n_spatial
    Bb = L // N
    inv_sqrt_c = 1.0 / math.sqrt(C)          # reference divides by sqrt(in_dim)

    def bn_tm(x_cl, i):
        # BatchNorm2d (eval, folded per-channel scale/shift) + TransformModule
        # (Linear(N,N) -> ReLU -> Linear(N,N) -> ReLU over the flattened spatial
        # dim).  The TM weights are block-diag expanded to (L, L) host-side so
        # all Bb batch segments run as ONE (C, L) @ (L, L) MXU matmul.
        # Elementwise / bias / ReLU math stays f32 (v5e-safe).
        xb = x_cl * bn_s_ref[i] + bn_b_ref[i]                  # (C, L) f32
        h = jnp.dot(xb.astype(bf16), w1_ref[i],
                    preferred_element_type=f32) + b1_ref[i]
        h = jnp.maximum(h, 0.0)
        h = jnp.dot(h.astype(bf16), w2_ref[i],
                    preferred_element_type=f32) + b2_ref[i]
        return jnp.maximum(h, 0.0)                             # (C, L) f32

    key_f = bn_tm(xk_ref[...], 0)
    qry_f = bn_tm(xq_ref[...], 1)
    val_f = bn_tm(xv_ref[...], 2)

    # 1x1 convs: one channel-contraction matmul each, batch-fused over the
    # L = Bb*N lane axis (they act on three different feature maps, so they
    # cannot share a single stacked weight).
    proj_q = _mm(qw_ref[...], qry_f.astype(bf16)) + qb_ref[...]   # (C8, L)
    proj_k = _mm(kw_ref[...], key_f.astype(bf16)) + kb_ref[...]   # (C8, L)
    proj_v = _mm(vw_ref[...], val_f.astype(bf16)) + vb_ref[...]   # (C,  L)

    # Attention is the only inherently per-batch piece: static unroll over the
    # Bb (small) batch segments; all slice offsets are static.
    for b in range(Bb):
        lo, hi = b * N, (b + 1) * N
        k_b = proj_k[:, lo:hi].astype(bf16)            # (C8, N)
        q_b = proj_q[:, lo:hi].astype(bf16)            # (C8, N)
        v_b = proj_v[:, lo:hi].astype(bf16)            # (C,  N)

        # energy[n, m] = sum_o k_b[o, n] * q_b[o, m]   (== torch bmm(K^T, Q));
        # bf16 operands are safe here: the softmax subtracts the row max.
        energy = lax.dot_general(
            k_b, q_b, (((0,), (0,)), ((), ())),
            preferred_element_type=f32) * inv_sqrt_c   # (N, N) f32

        # softmax over the last (query) axis == nn.Softmax(dim=-1) of the
        # reference; f32 math, EUP reciprocal for the divide.
        energy = energy - jnp.max(energy, axis=-1, keepdims=True)
        e = jnp.exp(energy)
        attn = e * pl.reciprocal(jnp.sum(e, axis=-1, keepdims=True), approx=True)

        # V[c, n] = sum_m proj_v[c, m] * attn[n, m]
        #   (== torch bmm(attn, proj_value).permute(0, 2, 1))
        v_cn = lax.dot_general(
            v_b, attn.astype(bf16), (((1,), (1,)), ((), ())),
            preferred_element_type=f32)                # (C, N) f32

        # Spill V to bf16 VMEM scratch: it is only ever consumed as a bf16
        # matmul operand, and must not stay live in vregs across the big head
        # TransformModule matmul below.
        v_buf_ref[:, lo:hi] = v_cn.astype(bf16)

    # merge1: 1x1 conv on channel-concat(x_value, V) expressed as its two
    # (C, C) halves -> two fat (C, C) @ (C, L) matmuls, no concatenate.
    t = (_mm(m1a_ref[...], xv_ref[...].astype(bf16))
         + _mm(m1b_ref[...], v_buf_ref[...])
         + m1bias_ref[...])                            # (C, L) f32

    # head branch: BN + TransformModule on T.
    front = bn_tm(t, 3)                                # (C, L) f32

    # merge2: 1x1 conv on channel-concat(front_res, V), same split.
    out = (_mm(m2a_ref[...], front.astype(bf16))
           + _mm(m2b_ref[...], v_buf_ref[...])
           + m2bias_ref[...])                          # (C, L) f32

    out_ref[...] = out.astype(out_ref.dtype)           # lane-dense (L >= 128) store


def _pick_b_blk(B, N, max_lane=512):
    """Smallest divisor d of B whose lane width d*N is a multiple of 128.

    Smallest-d keeps the grid as long as possible (>= 2 steps whenever the
    shapes allow it, for v7x megacore sharding) and bounds the block-diagonal
    TransformModule weight expansion (d > 1 grows those weights to (d*N)^2).
    Falls back to d = B (full-array block, always a legal BlockSpec).
    """
    for d in range(1, B + 1):
        if B % d:
            continue
        lane = d * N
        if lane % 128 == 0 and (d == 1 or lane <= max_lane):
            return d
    return B


def _expand_tm_blockdiag(w, b_blk):
    """(4, N, N) -> (4, b_blk*N, b_blk*N) block-diagonal = kron(I_b_blk, W)."""
    if b_blk == 1:
        return w
    four, n, _ = w.shape
    eye = jnp.eye(b_blk, dtype=w.dtype)
    wbd = jnp.einsum("ij,knm->kinjm", eye, w)
    return wbd.reshape(four, b_blk * n, b_blk * n)


def _cost_estimate(B, C, C8, N, b_blk, param_bytes):
    L = b_blk * N
    steps = B // b_blk
    per_step = (
        4 * 2 * 2 * C * L * L                        # BN+TM branches (block-diag form)
        + 2 * (2 * C8 * C * L) + 2 * C * C * L       # q/k/v 1x1 convs
        + b_blk * (2 * C8 * N * N + 2 * C * N * N)   # energy + attn@V per batch
        + 2 * (2 * 2 * C * C * L)                    # merge1 + merge2 (two halves each)
    )
    return pl.CostEstimate(
        flops=int(steps * per_step),
        transcendentals=int(B * (N * N + N)),
        bytes_accessed=int(4 * 4 * B * C * N + param_bytes),
    )


def basic_transformer2(x_key, x_query, x_value, params, b_blk=None):
    """x_*: (B, C, H, W) float32.  Returns (B, C, H, W) float32."""
    B, C, H, W = x_key.shape
    N = H * W
    C8 = params["q_w"].shape[0]

    if b_blk is None:
        b_blk = _pick_b_blk(B, N)
    assert B % b_blk == 0
    L = b_blk * N
    grid = (B // b_blk,)

    def to_lanes(x):
        # (B, C, H, W) -> (C, B*N): channels on sublanes, (batch, spatial)
        # fused on lanes.  Layout plumbing stays host-side in XLA.
        return x.reshape(B, C, N).transpose(1, 0, 2).reshape(C, B * N)

    xk = to_lanes(x_key)
    xq = to_lanes(x_query)
    xv = to_lanes(x_value)

    # Block-diag expand the TM weights / tile their biases so each grid step's
    # b_blk batch segments share one (C, L) @ (L, L) matmul.  Identity when
    # b_blk == 1 (i.e. whenever N is already a multiple of 128).
    tm_w1 = _expand_tm_blockdiag(params["tm_w1"], b_blk)
    tm_w2 = _expand_tm_blockdiag(params["tm_w2"], b_blk)
    tm_b1 = jnp.tile(params["tm_b1"], (1, 1, b_blk))
    tm_b2 = jnp.tile(params["tm_b2"], (1, 1, b_blk))

    param_arrays = [
        params["bn_scale"], params["bn_shift"],
        tm_w1, tm_b1, tm_w2, tm_b2,
        params["q_w"], params["q_b"],
        params["k_w"], params["k_b"],
        params["v_w"], params["v_b"],
        params["m1_wa"], params["m1_wb"], params["m1_b"],
        params["m2_wa"], params["m2_wb"], params["m2_b"],
    ]
    param_bytes = sum(a.size * a.dtype.itemsize for a in param_arrays)

    io_spec = pl.BlockSpec((C, L), lambda g: (0, g))

    def full_spec(arr):
        nd = arr.ndim
        return pl.BlockSpec(arr.shape, lambda g, _nd=nd: (0,) * _nd)

    # Explicit scoped-VMEM limit (v5e's default is only 16 MiB, v7x physical is
    # 64 MiB): double-buffered IO blocks + resident params + scratch, with
    # headroom, clamped to a value that is legal on every generation.
    block_bytes = 4 * C * L * 4            # 3 input blocks + 1 output block (f32)
    scratch_bytes = C * L * 2              # bf16 V scratch
    est = 2 * (block_bytes + param_bytes) + scratch_bytes
    vmem_limit = int(min(max(2 * est, 16 * 1024 * 1024), 48 * 1024 * 1024))

    out = pl.pallas_call(
        partial(basic_transformer2_kernel, n_spatial=N),
        out_shape=jax.ShapeDtypeStruct((C, B * N), jnp.float32),
        grid=grid,
        in_specs=[io_spec, io_spec, io_spec] + [full_spec(a) for a in param_arrays],
        out_specs=io_spec,
        scratch_shapes=[pltpu.VMEM((C, L), jnp.bfloat16)],
        compiler_params=pltpu.CompilerParams(
            dimension_semantics=("parallel",),
            vmem_limit_bytes=vmem_limit),
        cost_estimate=_cost_estimate(B, C, C8, N, b_blk, param_bytes),
    )(xk, xq, xv, *param_arrays)

    # (C, B*N) -> (B, C, H, W)
    return out.reshape(C, B, N).transpose(1, 0, 2).reshape(B, C, H, W)


def init_params(key, in_dim, patch_size):
    C = in_dim
    C8 = max(1, in_dim // 8)
    N = patch_size * patch_size
    bf16 = jnp.bfloat16
    ks = jax.random.split(key, 32)
    it = iter(ks)

    def nrm(shape, scale, dtype=jnp.float32):
        return (scale * jax.random.normal(next(it), shape, jnp.float32)).astype(dtype)

    # BatchNorm2d params (eval mode) for the 4 branches (key, query, value, head),
    # folded into per-channel scale/shift.
    gamma = 1.0 + 0.1 * jax.random.normal(next(it), (4, C), jnp.float32)
    beta = 0.1 * jax.random.normal(next(it), (4, C), jnp.float32)
    r_mean = 0.1 * jax.random.normal(next(it), (4, C), jnp.float32)
    r_var = jax.random.uniform(next(it), (4, C), jnp.float32, 0.5, 1.5)
    eps = 1e-5
    inv_std = gamma / jnp.sqrt(r_var + eps)
    bn_scale = inv_std.reshape(4, C, 1)
    bn_shift = (beta - r_mean * inv_std).reshape(4, C, 1)

    tm_scale = 1.0 / (N ** 0.5)
    conv_scale = 1.0 / (C ** 0.5)
    merge_scale = 1.0 / ((2 * C) ** 0.5)

    return {
        "bn_scale": bn_scale,
        "bn_shift": bn_shift,
        # TransformModule Linear weights stored as (in, out) = torch weight.T (bf16).
        "tm_w1": nrm((4, N, N), tm_scale, bf16),
        "tm_b1": nrm((4, 1, N), 0.1),
        "tm_w2": nrm((4, N, N), tm_scale, bf16),
        "tm_b2": nrm((4, 1, N), 0.1),
        # 1x1 conv weights stored as (Cout, Cin) = torch conv weight[:, :, 0, 0] (bf16).
        "q_w": nrm((C8, C), conv_scale, bf16),
        "q_b": nrm((C8, 1), 0.1),
        "k_w": nrm((C8, C), conv_scale, bf16),
        "k_b": nrm((C8, 1), 0.1),
        "v_w": nrm((C, C), conv_scale, bf16),
        "v_b": nrm((C, 1), 0.1),
        # merge conv weights split into the halves applied to each concat input:
        # m*_wa = W[:, :C, 0, 0] (x_value / front_res half), m*_wb = W[:, C:, 0, 0] (V half).
        "m1_wa": nrm((C, C), merge_scale, bf16),
        "m1_wb": nrm((C, C), merge_scale, bf16),
        "m1_b": nrm((C, 1), 0.1),
        "m2_wa": nrm((C, C), merge_scale, bf16),
        "m2_wb": nrm((C, C), merge_scale, bf16),
        "m2_b": nrm((C, 1), 0.1),
    }


if __name__ == "__main__":
    B = 2            # batch
    in_dim = 16      # channels (divisible by 8 for query/key conv)
    patch_size = 8   # spatial H = W = patch_size  (N = 64; b_blk=2 -> L = 128)

    root = jax.random.PRNGKey(0)
    kx, kparams = jax.random.split(root)
    k1, k2, k3 = jax.random.split(kx, 3)

    x_key = jax.random.normal(k1, (B, in_dim, patch_size, patch_size), jnp.float32)
    x_query = jax.random.normal(k2, (B, in_dim, patch_size, patch_size), jnp.float32)
    x_value = jax.random.normal(k3, (B, in_dim, patch_size, patch_size), jnp.float32)

    params = init_params(kparams, in_dim, patch_size)

    out = basic_transformer2(x_key, x_query, x_value, params)
    jax.block_until_ready(out)
    assert out.shape == (B, in_dim, patch_size, patch_size)
    assert bool(jnp.all(jnp.isfinite(out)))
    print("KERNEL_OK")
</pallas_src>

<mosaic_0001>
module attributes {stable_mosaic.version = 11 : i64} {
  func.func @basic_transformer2_kernel(%arg0: i32, %arg1: memref<16x128xf32, #tpu.memory_space<vmem>>, %arg2: memref<16x128xf32, #tpu.memory_space<vmem>>, %arg3: memref<16x128xf32, #tpu.memory_space<vmem>>, %arg4: memref<4x16x1xf32, #tpu.memory_space<vmem>>, %arg5: memref<4x16x1xf32, #tpu.memory_space<vmem>>, %arg6: memref<4x128x128xbf16, #tpu.memory_space<vmem>>, %arg7: memref<4x1x128xf32, #tpu.memory_space<vmem>>, %arg8: memref<4x128x128xbf16, #tpu.memory_space<vmem>>, %arg9: memref<4x1x128xf32, #tpu.memory_space<vmem>>, %arg10: memref<2x16xbf16, #tpu.memory_space<vmem>>, %arg11: memref<2x1xf32, #tpu.memory_space<vmem>>, %arg12: memref<2x16xbf16, #tpu.memory_space<vmem>>, %arg13: memref<2x1xf32, #tpu.memory_space<vmem>>, %arg14: memref<16x16xbf16, #tpu.memory_space<vmem>>, %arg15: memref<16x1xf32, #tpu.memory_space<vmem>>, %arg16: memref<16x16xbf16, #tpu.memory_space<vmem>>, %arg17: memref<16x16xbf16, #tpu.memory_space<vmem>>, %arg18: memref<16x1xf32, #tpu.memory_space<vmem>>, %arg19: memref<16x16xbf16, #tpu.memory_space<vmem>>, %arg20: memref<16x16xbf16, #tpu.memory_space<vmem>>, %arg21: memref<16x1xf32, #tpu.memory_space<vmem>>, %arg22: memref<16x128xf32, #tpu.memory_space<vmem>>, %arg23: memref<16x128xbf16, #tpu.memory_space<vmem>>) attributes {dimension_semantics = [#tpu.dimension_semantics<parallel>], iteration_bounds = array<i64: 1>, scalar_prefetch = 0 : i64, scratch_operands = 1 : i64, tpu.core_type = #tpu.core_type<tc>, window_params = [{transform_indices = @transform_0, window_bounds = array<i64: 16, 128>}, {transform_indices = @transform_1, window_bounds = array<i64: 16, 128>}, {transform_indices = @transform_2, window_bounds = array<i64: 16, 128>}, {pipeline_mode = #tpu.pipeline_mode<synchronous>, transform_indices = @transform_3, window_bounds = array<i64: 4, 16, 1>}, {pipeline_mode = #tpu.pipeline_mode<synchronous>, transform_indices = @transform_4, window_bounds = array<i64: 4, 16, 1>}, {pipeline_mode = #tpu.pipeline_mode<synchronous>, transform_indices = @transform_5, window_bounds = array<i64: 4, 128, 128>}, {pipeline_mode = #tpu.pipeline_mode<synchronous>, transform_indices = @transform_6, window_bounds = array<i64: 4, 1, 128>}, {pipeline_mode = #tpu.pipeline_mode<synchronous>, transform_indices = @transform_7, window_bounds = array<i64: 4, 128, 128>}, {pipeline_mode = #tpu.pipeline_mode<synchronous>, transform_indices = @transform_8, window_bounds = array<i64: 4, 1, 128>}, {pipeline_mode = #tpu.pipeline_mode<synchronous>, transform_indices = @transform_9, window_bounds = array<i64: 2, 16>}, {pipeline_mode = #tpu.pipeline_mode<synchronous>, transform_indices = @transform_10, window_bounds = array<i64: 2, 1>}, {pipeline_mode = #tpu.pipeline_mode<synchronous>, transform_indices = @transform_11, window_bounds = array<i64: 2, 16>}, {pipeline_mode = #tpu.pipeline_mode<synchronous>, transform_indices = @transform_12, window_bounds = array<i64: 2, 1>}, {pipeline_mode = #tpu.pipeline_mode<synchronous>, transform_indices = @transform_13, window_bounds = array<i64: 16, 16>}, {pipeline_mode = #tpu.pipeline_mode<synchronous>, transform_indices = @transform_14, window_bounds = array<i64: 16, 1>}, {pipeline_mode = #tpu.pipeline_mode<synchronous>, transform_indices = @transform_15, window_bounds = array<i64: 16, 16>}, {pipeline_mode = #tpu.pipeline_mode<synchronous>, transform_indices = @transform_16, window_bounds = array<i64: 16, 16>}, {pipeline_mode = #tpu.pipeline_mode<synchronous>, transform_indices = @transform_17, window_bounds = array<i64: 16, 1>}, {pipeline_mode = #tpu.pipeline_mode<synchronous>, transform_indices = @transform_18, window_bounds = array<i64: 16, 16>}, {pipeline_mode = #tpu.pipeline_mode<synchronous>, transform_indices = @transform_19, window_bounds = array<i64: 16, 16>}, {pipeline_mode = #tpu.pipeline_mode<synchronous>, transform_indices = @transform_20, window_bounds = array<i64: 16, 1>}, {transform_indices = @transform_21, window_bounds = array<i64: 16, 128>}]} {
    %c0 = arith.constant 0 : index
    %c0_0 = arith.constant 0 : index
    %0 = vector.load %arg1[%c0, %c0_0] : memref<16x128xf32, #tpu.memory_space<vmem>>, vector<16x128xf32>
    %c0_1 = arith.constant 0 : index
    %c0_2 = arith.constant 0 : index
    %c0_3 = arith.constant 0 : index
    %1 = vector.load %arg4[%c0_1, %c0_2, %c0_3] : memref<4x16x1xf32, #tpu.memory_space<vmem>>, vector<1x16x1xf32>
    %2 = vector.shape_cast %1 : vector<1x16x1xf32> to vector<16x1xf32>
    %3 = vector.broadcast %2 : vector<16x1xf32> to vector<16x128xf32>
    %4 = arith.mulf %0, %3 : vector<16x128xf32>
    %c0_4 = arith.constant 0 : index
    %c0_5 = arith.constant 0 : index
    %c0_6 = arith.constant 0 : index
    %5 = vector.load %arg5[%c0_4, %c0_5, %c0_6] : memref<4x16x1xf32, #tpu.memory_space<vmem>>, vector<1x16x1xf32>
    %6 = vector.shape_cast %5 : vector<1x16x1xf32> to vector<16x1xf32>
    %7 = vector.broadcast %6 : vector<16x1xf32> to vector<16x128xf32>
    %8 = arith.addf %4, %7 : vector<16x128xf32>
    %9 = arith.truncf %8 : vector<16x128xf32> to vector<16x128xbf16>
    %c0_7 = arith.constant 0 : index
    %c0_8 = arith.constant 0 : index
    %c0_9 = arith.constant 0 : index
    %10 = vector.load %arg6[%c0_7, %c0_8, %c0_9] : memref<4x128x128xbf16, #tpu.memory_space<vmem>>, vector<1x128x128xbf16>
    %11 = vector.shape_cast %10 : vector<1x128x128xbf16> to vector<128x128xbf16>
    %cst = arith.constant dense<0.000000e+00> : vector<16x128xf32>
    %12 = tpu.matmul %9, %11, %cst {dimension_numbers = #tpu.dot_dimension_numbers<[1], [0], [0], [1], [0, 0, 1, 1], [], []>} : vector<16x128xbf16>, vector<128x128xbf16>, vector<16x128xf32> -> vector<16x128xf32>
    %c0_10 = arith.constant 0 : index
    %c0_11 = arith.constant 0 : index
    %c0_12 = arith.constant 0 : index
    %13 = vector.load %arg7[%c0_10, %c0_11, %c0_12] : memref<4x1x128xf32, #tpu.memory_space<vmem>>, vector<1x1x128xf32>
    %14 = vector.shape_cast %13 : vector<1x1x128xf32> to vector<1x128xf32>
    %15 = vector.broadcast %14 : vector<1x128xf32> to vector<16x128xf32>
    %16 = arith.addf %12, %15 : vector<16x128xf32>
    %cst_13 = arith.constant 0.000000e+00 : f32
    %17 = vector.broadcast %cst_13 : f32 to vector<16x128xf32>
    %18 = arith.maximumf %16, %17 : vector<16x128xf32>
    %19 = arith.truncf %18 : vector<16x128xf32> to vector<16x128xbf16>
    %c0_14 = arith.constant 0 : index
    %c0_15 = arith.constant 0 : index
    %c0_16 = arith.constant 0 : index
    %20 = vector.load %arg8[%c0_14, %c0_15, %c0_16] : memref<4x128x128xbf16, #tpu.memory_space<vmem>>, vector<1x128x128xbf16>
    %21 = vector.shape_cast %20 : vector<1x128x128xbf16> to vector<128x128xbf16>
    %cst_17 = arith.constant dense<0.000000e+00> : vector<16x128xf32>
    %22 = tpu.matmul %19, %21, %cst_17 {dimension_numbers = #tpu.dot_dimension_numbers<[1], [0], [0], [1], [0, 0, 1, 1], [], []>} : vector<16x128xbf16>, vector<128x128xbf16>, vector<16x128xf32> -> vector<16x128xf32>
    %c0_18 = arith.constant 0 : index
    %c0_19 = arith.constant 0 : index
    %c0_20 = arith.constant 0 : index
    %23 = vector.load %arg9[%c0_18, %c0_19, %c0_20] : memref<4x1x128xf32, #tpu.memory_space<vmem>>, vector<1x1x128xf32>
    %24 = vector.shape_cast %23 : vector<1x1x128xf32> to vector<1x128xf32>
    %25 = vector.broadcast %24 : vector<1x128xf32> to vector<16x128xf32>
    %26 = arith.addf %22, %25 : vector<16x128xf32>
    %cst_21 = arith.constant 0.000000e+00 : f32
    %27 = vector.broadcast %cst_21 : f32 to vector<16x128xf32>
    %28 = arith.maximumf %26, %27 : vector<16x128xf32>
    %c0_22 = arith.constant 0 : index
    %c0_23 = arith.constant 0 : index
    %29 = vector.load %arg2[%c0_22, %c0_23] : memref<16x128xf32, #tpu.memory_space<vmem>>, vector<16x128xf32>
    %c1 = arith.constant 1 : index
    %c0_24 = arith.constant 0 : index
    %c0_25 = arith.constant 0 : index
    %30 = vector.load %arg4[%c1, %c0_24, %c0_25] : memref<4x16x1xf32, #tpu.memory_space<vmem>>, vector<1x16x1xf32>
    %31 = vector.shape_cast %30 : vector<1x16x1xf32> to vector<16x1xf32>
    %32 = vector.broadcast %31 : vector<16x1xf32> to vector<16x128xf32>
    %33 = arith.mulf %29, %32 : vector<16x128xf32>
    %c1_26 = arith.constant 1 : index
    %c0_27 = arith.constant 0 : index
    %c0_28 = arith.constant 0 : index
    %34 = vector.load %arg5[%c1_26, %c0_27, %c0_28] : memref<4x16x1xf32, #tpu.memory_space<vmem>>, vector<1x16x1xf32>
    %35 = vector.shape_cast %34 : vector<1x16x1xf32> to vector<16x1xf32>
    %36 = vector.broadcast %35 : vector<16x1xf32> to vector<16x128xf32>
    %37 = arith.addf %33, %36 : vector<16x128xf32>
    %38 = arith.truncf %37 : vector<16x128xf32> to vector<16x128xbf16>
    %c1_29 = arith.constant 1 : index
    %c0_30 = arith.constant 0 : index
    %c0_31 = arith.constant 0 : index
    %39 = vector.load %arg6[%c1_29, %c0_30, %c0_31] : memref<4x128x128xbf16, #tpu.memory_space<vmem>>, vector<1x128x128xbf16>
    %40 = vector.shape_cast %39 : vector<1x128x128xbf16> to vector<128x128xbf16>
    %cst_32 = arith.constant dense<0.000000e+00> : vector<16x128xf32>
    %41 = tpu.matmul %38, %40, %cst_32 {dimension_numbers = #tpu.dot_dimension_numbers<[1], [0], [0], [1], [0, 0, 1, 1], [], []>} : vector<16x128xbf16>, vector<128x128xbf16>, vector<16x128xf32> -> vector<16x128xf32>
    %c1_33 = arith.constant 1 : index
    %c0_34 = arith.constant 0 : index
    %c0_35 = arith.constant 0 : index
    %42 = vector.load %arg7[%c1_33, %c0_34, %c0_35] : memref<4x1x128xf32, #tpu.memory_space<vmem>>, vector<1x1x128xf32>
    %43 = vector.shape_cast %42 : vector<1x1x128xf32> to vector<1x128xf32>
    %44 = vector.broadcast %43 : vector<1x128xf32> to vector<16x128xf32>
    %45 = arith.addf %41, %44 : vector<16x128xf32>
    %cst_36 = arith.constant 0.000000e+00 : f32
    %46 = vector.broadcast %cst_36 : f32 to vector<16x128xf32>
    %47 = arith.maximumf %45, %46 : vector<16x128xf32>
    %48 = arith.truncf %47 : vector<16x128xf32> to vector<16x128xbf16>
    %c1_37 = arith.constant 1 : index
    %c0_38 = arith.constant 0 : index
    %c0_39 = arith.constant 0 : index
    %49 = vector.load %arg8[%c1_37, %c0_38, %c0_39] : memref<4x128x128xbf16, #tpu.memory_space<vmem>>, vector<1x128x128xbf16>
    %50 = vector.shape_cast %49 : vector<1x128x128xbf16> to vector<128x128xbf16>
    %cst_40 = arith.constant dense<0.000000e+00> : vector<16x128xf32>
    %51 = tpu.matmul %48, %50, %cst_40 {dimension_numbers = #tpu.dot_dimension_numbers<[1], [0], [0], [1], [0, 0, 1, 1], [], []>} : vector<16x128xbf16>, vector<128x128xbf16>, vector<16x128xf32> -> vector<16x128xf32>
    %c1_41 = arith.constant 1 : index
    %c0_42 = arith.constant 0 : index
    %c0_43 = arith.constant 0 : index
    %52 = vector.load %arg9[%c1_41, %c0_42, %c0_43] : memref<4x1x128xf32, #tpu.memory_space<vmem>>, vector<1x1x128xf32>
    %53 = vector.shape_cast %52 : vector<1x1x128xf32> to vector<1x128xf32>
    %54 = vector.broadcast %53 : vector<1x128xf32> to vector<16x128xf32>
    %55 = arith.addf %51, %54 : vector<16x128xf32>
    %cst_44 = arith.constant 0.000000e+00 : f32
    %56 = vector.broadcast %cst_44 : f32 to vector<16x128xf32>
    %57 = arith.maximumf %55, %56 : vector<16x128xf32>
    %c0_45 = arith.constant 0 : index
    %c0_46 = arith.constant 0 : index
    %58 = vector.load %arg3[%c0_45, %c0_46] : memref<16x128xf32, #tpu.memory_space<vmem>>, vector<16x128xf32>
    %c2 = arith.constant 2 : index
    %c0_47 = arith.constant 0 : index
    %c0_48 = arith.constant 0 : index
    %59 = vector.load %arg4[%c2, %c0_47, %c0_48] : memref<4x16x1xf32, #tpu.memory_space<vmem>>, vector<1x16x1xf32>
    %60 = vector.shape_cast %59 : vector<1x16x1xf32> to vector<16x1xf32>
    %61 = vector.broadcast %60 : vector<16x1xf32> to vector<16x128xf32>
    %62 = arith.mulf %58, %61 : vector<16x128xf32>
    %c2_49 = arith.constant 2 : index
    %c0_50 = arith.constant 0 : index
    %c0_51 = arith.constant 0 : index
    %63 = vector.load %arg5[%c2_49, %c0_50, %c0_51] : memref<4x16x1xf32, #tpu.memory_space<vmem>>, vector<1x16x1xf32>
    %64 = vector.shape_cast %63 : vector<1x16x1xf32> to vector<16x1xf32>
    %65 = vector.broadcast %64 : vector<16x1xf32> to vector<16x128xf32>
    %66 = arith.addf %62, %65 : vector<16x128xf32>
    %67 = arith.truncf %66 : vector<16x128xf32> to vector<16x128xbf16>
    %c2_52 = arith.constant 2 : index
    %c0_53 = arith.constant 0 : index
    %c0_54 = arith.constant 0 : index
    %68 = vector.load %arg6[%c2_52, %c0_53, %c0_54] : memref<4x128x128xbf16, #tpu.memory_space<vmem>>, vector<1x128x128xbf16>
    %69 = vector.shape_cast %68 : vector<1x128x128xbf16> to vector<128x128xbf16>
    %cst_55 = arith.constant dense<0.000000e+00> : vector<16x128xf32>
    %70 = tpu.matmul %67, %69, %cst_55 {dimension_numbers = #tpu.dot_dimension_numbers<[1], [0], [0], [1], [0, 0, 1, 1], [], []>} : vector<16x128xbf16>, vector<128x128xbf16>, vector<16x128xf32> -> vector<16x128xf32>
    %c2_56 = arith.constant 2 : index
    %c0_57 = arith.constant 0 : index
    %c0_58 = arith.constant 0 : index
    %71 = vector.load %arg7[%c2_56, %c0_57, %c0_58] : memref<4x1x128xf32, #tpu.memory_space<vmem>>, vector<1x1x128xf32>
    %72 = vector.shape_cast %71 : vector<1x1x128xf32> to vector<1x128xf32>
    %73 = vector.broadcast %72 : vector<1x128xf32> to vector<16x128xf32>
    %74 = arith.addf %70, %73 : vector<16x128xf32>
    %cst_59 = arith.constant 0.000000e+00 : f32
    %75 = vector.broadcast %cst_59 : f32 to vector<16x128xf32>
    %76 = arith.maximumf %74, %75 : vector<16x128xf32>
    %77 = arith.truncf %76 : vector<16x128xf32> to vector<16x128xbf16>
    %c2_60 = arith.constant 2 : index
    %c0_61 = arith.constant 0 : index
    %c0_62 = arith.constant 0 : index
    %78 = vector.load %arg8[%c2_60, %c0_61, %c0_62] : memref<4x128x128xbf16, #tpu.memory_space<vmem>>, vector<1x128x128xbf16>
    %79 = vector.shape_cast %78 : vector<1x128x128xbf16> to vector<128x128xbf16>
    %cst_63 = arith.constant dense<0.000000e+00> : vector<16x128xf32>
    %80 = tpu.matmul %77, %79, %cst_63 {dimension_numbers = #tpu.dot_dimension_numbers<[1], [0], [0], [1], [0, 0, 1, 1], [], []>} : vector<16x128xbf16>, vector<128x128xbf16>, vector<16x128xf32> -> vector<16x128xf32>
    %c2_64 = arith.constant 2 : index
    %c0_65 = arith.constant 0 : index
    %c0_66 = arith.constant 0 : index
    %81 = vector.load %arg9[%c2_64, %c0_65, %c0_66] : memref<4x1x128xf32, #tpu.memory_space<vmem>>, vector<1x1x128xf32>
    %82 = vector.shape_cast %81 : vector<1x1x128xf32> to vector<1x128xf32>
    %83 = vector.broadcast %82 : vector<1x128xf32> to vector<16x128xf32>
    %84 = arith.addf %80, %83 : vector<16x128xf32>
    %cst_67 = arith.constant 0.000000e+00 : f32
    %85 = vector.broadcast %cst_67 : f32 to vector<16x128xf32>
    %86 = arith.maximumf %84, %85 : vector<16x128xf32>
    %c0_68 = arith.constant 0 : index
    %c0_69 = arith.constant 0 : index
    %87 = vector.load %arg10[%c0_68, %c0_69] : memref<2x16xbf16, #tpu.memory_space<vmem>>, vector<2x16xbf16>
    %88 = arith.truncf %57 : vector<16x128xf32> to vector<16x128xbf16>
    %cst_70 = arith.constant dense<0.000000e+00> : vector<2x128xf32>
    %89 = tpu.matmul %87, %88, %cst_70 {dimension_numbers = #tpu.dot_dimension_numbers<[1], [0], [0], [1], [0, 0, 1, 1], [], []>} : vector<2x16xbf16>, vector<16x128xbf16>, vector<2x128xf32> -> vector<2x128xf32>
    %c0_71 = arith.constant 0 : index
    %c0_72 = arith.constant 0 : index
    %90 = vector.load %arg11[%c0_71, %c0_72] : memref<2x1xf32, #tpu.memory_space<vmem>>, vector<2x1xf32>
    %91 = vector.broadcast %90 : vector<2x1xf32> to vector<2x128xf32>
    %92 = arith.addf %89, %91 : vector<2x128xf32>
    %c0_73 = arith.constant 0 : index
    %c0_74 = arith.constant 0 : index
    %93 = vector.load %arg12[%c0_73, %c0_74] : memref<2x16xbf16, #tpu.memory_space<vmem>>, vector<2x16xbf16>
    %94 = arith.truncf %28 : vector<16x128xf32> to vector<16x128xbf16>
    %cst_75 = arith.constant dense<0.000000e+00> : vector<2x128xf32>
    %95 = tpu.matmul %93, %94, %cst_75 {dimension_numbers = #tpu.dot_dimension_numbers<[1], [0], [0], [1], [0, 0, 1, 1], [], []>} : vector<2x16xbf16>, vector<16x128xbf16>, vector<2x128xf32> -> vector<2x128xf32>
    %c0_76 = arith.constant 0 : index
    %c0_77 = arith.constant 0 : index
    %96 = vector.load %arg13[%c0_76, %c0_77] : memref<2x1xf32, #tpu.memory_space<vmem>>, vector<2x1xf32>
    %97 = vector.broadcast %96 : vector<2x1xf32> to vector<2x128xf32>
    %98 = arith.addf %95, %97 : vector<2x128xf32>
    %c0_78 = arith.constant 0 : index
    %c0_79 = arith.constant 0 : index
    %99 = vector.load %arg14[%c0_78, %c0_79] : memref<16x16xbf16, #tpu.memory_space<vmem>>, vector<16x16xbf16>
    %100 = arith.truncf %86 : vector<16x128xf32> to vector<16x128xbf16>
    %cst_80 = arith.constant dense<0.000000e+00> : vector<16x128xf32>
    %101 = tpu.matmul %99, %100, %cst_80 {dimension_numbers = #tpu.dot_dimension_numbers<[1], [0], [0], [1], [0, 0, 1, 1], [], []>} : vector<16x16xbf16>, vector<16x128xbf16>, vector<16x128xf32> -> vector<16x128xf32>
    %c0_81 = arith.constant 0 : index
    %c0_82 = arith.constant 0 : index
    %102 = vector.load %arg15[%c0_81, %c0_82] : memref<16x1xf32, #tpu.memory_space<vmem>>, vector<16x1xf32>
    %103 = vector.broadcast %102 : vector<16x1xf32> to vector<16x128xf32>
    %104 = arith.addf %101, %103 : vector<16x128xf32>
    %105 = vector.extract_strided_slice %98 {offsets = [0, 0], sizes = [2, 64], strides = [1, 1]} : vector<2x128xf32> to vector<2x64xf32>
    %106 = arith.truncf %105 : vector<2x64xf32> to vector<2x64xbf16>
    %107 = vector.extract_strided_slice %92 {offsets = [0, 0], sizes = [2, 64], strides = [1, 1]} : vector<2x128xf32> to vector<2x64xf32>
    %108 = arith.truncf %107 : vector<2x64xf32> to vector<2x64xbf16>
    %109 = vector.extract_strided_slice %104 {offsets = [0, 0], sizes = [16, 64], strides = [1, 1]} : vector<16x128xf32> to vector<16x64xf32>
    %110 = arith.truncf %109 : vector<16x64xf32> to vector<16x64xbf16>
    %cst_83 = arith.constant dense<0.000000e+00> : vector<64x64xf32>
    %111 = tpu.matmul %106, %108, %cst_83 {dimension_numbers = #tpu.dot_dimension_numbers<[0], [0], [1], [1], [0, 1, 1, 1], [], []>} : vector<2x64xbf16>, vector<2x64xbf16>, vector<64x64xf32> -> vector<64x64xf32>
    %cst_84 = arith.constant 2.500000e-01 : f32
    %112 = vector.broadcast %cst_84 : f32 to vector<64x64xf32>
    %113 = arith.mulf %111, %112 : vector<64x64xf32>
    %cst_85 = arith.constant dense<0xFF800000> : vector<64xf32>
    %114 = vector.multi_reduction <maximumf>, %113, %cst_85 [1] : vector<64x64xf32> to vector<64xf32>
    %115 = vector.shape_cast %114 : vector<64xf32> to vector<64x1xf32>
    %116 = vector.broadcast %115 : vector<64x1xf32> to vector<64x64xf32>
    %117 = arith.subf %113, %116 : vector<64x64xf32>
    %118 = math.exp %117 : vector<64x64xf32>
    %cst_86 = arith.constant dense<0.000000e+00> : vector<64xf32>
    %119 = vector.multi_reduction <add>, %118, %cst_86 [1] : vector<64x64xf32> to vector<64xf32>
    %120 = vector.shape_cast %119 : vector<64xf32> to vector<64x1xf32>
    %121 = tpu.reciprocal %120 {approx = true} : vector<64x1xf32> -> vector<64x1xf32>
    %122 = vector.broadcast %121 : vector<64x1xf32> to vector<64x64xf32>
    %123 = arith.mulf %118, %122 : vector<64x64xf32>
    %124 = arith.truncf %123 : vector<64x64xf32> to vector<64x64xbf16>
    %cst_87 = arith.constant dense<0.000000e+00> : vector<16x64xf32>
    %125 = tpu.matmul %110, %124, %cst_87 {dimension_numbers = #tpu.dot_dimension_numbers<[1], [1], [0], [0], [0, 0, 1, 0], [], []>} : vector<16x64xbf16>, vector<64x64xbf16>, vector<16x64xf32> -> vector<16x64xf32>
    %126 = arith.truncf %125 : vector<16x64xf32> to vector<16x64xbf16>
    %c0_88 = arith.constant 0 : index
    %c0_89 = arith.constant 0 : index
    %127 = vector.load %arg23[%c0_88, %c0_89] : memref<16x128xbf16, #tpu.memory_space<vmem>>, vector<16x64xbf16>
    tpu.vector_store %arg23[%c0_88, %c0_89], %126 {strides = array<i32>} : memref<16x128xbf16, #tpu.memory_space<vmem>>, vector<16x64xbf16>,
    %128 = vector.extract_strided_slice %98 {offsets = [0, 64], sizes = [2, 64], strides = [1, 1]} : vector<2x128xf32> to vector<2x64xf32>
    %129 = arith.truncf %128 : vector<2x64xf32> to vector<2x64xbf16>
    %130 = vector.extract_strided_slice %92 {offsets = [0, 64], sizes = [2, 64], strides = [1, 1]} : vector<2x128xf32> to vector<2x64xf32>
    %131 = arith.truncf %130 : vector<2x64xf32> to vector<2x64xbf16>
    %132 = vector.extract_strided_slice %104 {offsets = [0, 64], sizes = [16, 64], strides = [1, 1]} : vector<16x128xf32> to vector<16x64xf32>
    %133 = arith.truncf %132 : vector<16x64xf32> to vector<16x64xbf16>
    %cst_90 = arith.constant dense<0.000000e+00> : vector<64x64xf32>
    %134 = tpu.matmul %129, %131, %cst_90 {dimension_numbers = #tpu.dot_dimension_numbers<[0], [0], [1], [1], [0, 1, 1, 1], [], []>} : vector<2x64xbf16>, vector<2x64xbf16>, vector<64x64xf32> -> vector<64x64xf32>
    %cst_91 = arith.constant 2.500000e-01 : f32
    %135 = vector.broadcast %cst_91 : f32 to vector<64x64xf32>
    %136 = arith.mulf %134, %135 : vector<64x64xf32>
    %cst_92 = arith.constant dense<0xFF800000> : vector<64xf32>
    %137 = vector.multi_reduction <maximumf>, %136, %cst_92 [1] : vector<64x64xf32> to vector<64xf32>
    %138 = vector.shape_cast %137 : vector<64xf32> to vector<64x1xf32>
    %139 = vector.broadcast %138 : vector<64x1xf32> to vector<64x64xf32>
    %140 = arith.subf %136, %139 : vector<64x64xf32>
    %141 = math.exp %140 : vector<64x64xf32>
    %cst_93 = arith.constant dense<0.000000e+00> : vector<64xf32>
    %142 = vector.multi_reduction <add>, %141, %cst_93 [1] : vector<64x64xf32> to vector<64xf32>
    %143 = vector.shape_cast %142 : vector<64xf32> to vector<64x1xf32>
    %144 = tpu.reciprocal %143 {approx = true} : vector<64x1xf32> -> vector<64x1xf32>
    %145 = vector.broadcast %144 : vector<64x1xf32> to vector<64x64xf32>
    %146 = arith.mulf %141, %145 : vector<64x64xf32>
    %147 = arith.truncf %146 : vector<64x64xf32> to vector<64x64xbf16>
    %cst_94 = arith.constant dense<0.000000e+00> : vector<16x64xf32>
    %148 = tpu.matmul %133, %147, %cst_94 {dimension_numbers = #tpu.dot_dimension_numbers<[1], [1], [0], [0], [0, 0, 1, 0], [], []>} : vector<16x64xbf16>, vector<64x64xbf16>, vector<16x64xf32> -> vector<16x64xf32>
    %149 = arith.truncf %148 : vector<16x64xf32> to vector<16x64xbf16>
    %c0_95 = arith.constant 0 : index
    %c64 = arith.constant 64 : index
    %150 = vector.load %arg23[%c0_95, %c64] : memref<16x128xbf16, #tpu.memory_space<vmem>>, vector<16x64xbf16>
    tpu.vector_store %arg23[%c0_95, %c64], %149 {strides = array<i32>} : memref<16x128xbf16, #tpu.memory_space<vmem>>, vector<16x64xbf16>,
    %c0_96 = arith.constant 0 : index
    %c0_97 = arith.constant 0 : index
    %151 = vector.load %arg16[%c0_96, %c0_97] : memref<16x16xbf16, #tpu.memory_space<vmem>>, vector<16x16xbf16>
    %c0_98 = arith.constant 0 : index
    %c0_99 = arith.constant 0 : index
    %152 = vector.load %arg3[%c0_98, %c0_99] : memref<16x128xf32, #tpu.memory_space<vmem>>, vector<16x128xf32>
    %153 = arith.truncf %152 : vector<16x128xf32> to vector<16x128xbf16>
    %cst_100 = arith.constant dense<0.000000e+00> : vector<16x128xf32>
    %154 = tpu.matmul %151, %153, %cst_100 {dimension_numbers = #tpu.dot_dimension_numbers<[1], [0], [0], [1], [0, 0, 1, 1], [], []>} : vector<16x16xbf16>, vector<16x128xbf16>, vector<16x128xf32> -> vector<16x128xf32>
    %c0_101 = arith.constant 0 : index
    %c0_102 = arith.constant 0 : index
    %155 = vector.load %arg17[%c0_101, %c0_102] : memref<16x16xbf16, #tpu.memory_space<vmem>>, vector<16x16xbf16>
    %c0_103 = arith.constant 0 : index
    %c0_104 = arith.constant 0 : index
    %156 = vector.load %arg23[%c0_103, %c0_104] : memref<16x128xbf16, #tpu.memory_space<vmem>>, vector<16x128xbf16>
    %cst_105 = arith.constant dense<0.000000e+00> : vector<16x128xf32>
    %157 = tpu.matmul %155, %156, %cst_105 {dimension_numbers = #tpu.dot_dimension_numbers<[1], [0], [0], [1], [0, 0, 1, 1], [], []>} : vector<16x16xbf16>, vector<16x128xbf16>, vector<16x128xf32> -> vector<16x128xf32>
    %158 = arith.addf %154, %157 : vector<16x128xf32>
    %c0_106 = arith.constant 0 : index
    %c0_107 = arith.constant 0 : index
    %159 = vector.load %arg18[%c0_106, %c0_107] : memref<16x1xf32, #tpu.memory_space<vmem>>, vector<16x1xf32>
    %160 = vector.broadcast %159 : vector<16x1xf32> to vector<16x128xf32>
    %161 = arith.addf %158, %160 : vector<16x128xf32>
    %c3 = arith.constant 3 : index
    %c0_108 = arith.constant 0 : index
    %c0_109 = arith.constant 0 : index
    %162 = vector.load %arg4[%c3, %c0_108, %c0_109] : memref<4x16x1xf32, #tpu.memory_space<vmem>>, vector<1x16x1xf32>
    %163 = vector.shape_cast %162 : vector<1x16x1xf32> to vector<16x1xf32>
    %164 = vector.broadcast %163 : vector<16x1xf32> to vector<16x128xf32>
    %165 = arith.mulf %161, %164 : vector<16x128xf32>
    %c3_110 = arith.constant 3 : index
    %c0_111 = arith.constant 0 : index
    %c0_112 = arith.constant 0 : index
    %166 = vector.load %arg5[%c3_110, %c0_111, %c0_112] : memref<4x16x1xf32, #tpu.memory_space<vmem>>, vector<1x16x1xf32>
    %167 = vector.shape_cast %166 : vector<1x16x1xf32> to vector<16x1xf32>
    %168 = vector.broadcast %167 : vector<16x1xf32> to vector<16x128xf32>
    %169 = arith.addf %165, %168 : vector<16x128xf32>
    %170 = arith.truncf %169 : vector<16x128xf32> to vector<16x128xbf16>
    %c3_113 = arith.constant 3 : index
    %c0_114 = arith.constant 0 : index
    %c0_115 = arith.constant 0 : index
    %171 = vector.load %arg6[%c3_113, %c0_114, %c0_115] : memref<4x128x128xbf16, #tpu.memory_space<vmem>>, vector<1x128x128xbf16>
    %172 = vector.shape_cast %171 : vector<1x128x128xbf16> to vector<128x128xbf16>
    %cst_116 = arith.constant dense<0.000000e+00> : vector<16x128xf32>
    %173 = tpu.matmul %170, %172, %cst_116 {dimension_numbers = #tpu.dot_dimension_numbers<[1], [0], [0], [1], [0, 0, 1, 1], [], []>} : vector<16x128xbf16>, vector<128x128xbf16>, vector<16x128xf32> -> vector<16x128xf32>
    %c3_117 = arith.constant 3 : index
    %c0_118 = arith.constant 0 : index
    %c0_119 = arith.constant 0 : index
    %174 = vector.load %arg7[%c3_117, %c0_118, %c0_119] : memref<4x1x128xf32, #tpu.memory_space<vmem>>, vector<1x1x128xf32>
    %175 = vector.shape_cast %174 : vector<1x1x128xf32> to vector<1x128xf32>
    %176 = vector.broadcast %175 : vector<1x128xf32> to vector<16x128xf32>
    %177 = arith.addf %173, %176 : vector<16x128xf32>
    %cst_120 = arith.constant 0.000000e+00 : f32
    %178 = vector.broadcast %cst_120 : f32 to vector<16x128xf32>
    %179 = arith.maximumf %177, %178 : vector<16x128xf32>
    %180 = arith.truncf %179 : vector<16x128xf32> to vector<16x128xbf16>
    %c3_121 = arith.constant 3 : index
    %c0_122 = arith.constant 0 : index
    %c0_123 = arith.constant 0 : index
    %181 = vector.load %arg8[%c3_121, %c0_122, %c0_123] : memref<4x128x128xbf16, #tpu.memory_space<vmem>>, vector<1x128x128xbf16>
    %182 = vector.shape_cast %181 : vector<1x128x128xbf16> to vector<128x128xbf16>
    %cst_124 = arith.constant dense<0.000000e+00> : vector<16x128xf32>
    %183 = tpu.matmul %180, %182, %cst_124 {dimension_numbers = #tpu.dot_dimension_numbers<[1], [0], [0], [1], [0, 0, 1, 1], [], []>} : vector<16x128xbf16>, vector<128x128xbf16>, vector<16x128xf32> -> vector<16x128xf32>
    %c3_125 = arith.constant 3 : index
    %c0_126 = arith.constant 0 : index
    %c0_127 = arith.constant 0 : index
    %184 = vector.load %arg9[%c3_125, %c0_126, %c0_127] : memref<4x1x128xf32, #tpu.memory_space<vmem>>, vector<1x1x128xf32>
    %185 = vector.shape_cast %184 : vector<1x1x128xf32> to vector<1x128xf32>
    %186 = vector.broadcast %185 : vector<1x128xf32> to vector<16x128xf32>
    %187 = arith.addf %183, %186 : vector<16x128xf32>
    %cst_128 = arith.constant 0.000000e+00 : f32
    %188 = vector.broadcast %cst_128 : f32 to vector<16x128xf32>
    %189 = arith.maximumf %187, %188 : vector<16x128xf32>
    %c0_129 = arith.constant 0 : index
    %c0_130 = arith.constant 0 : index
    %190 = vector.load %arg19[%c0_129, %c0_130] : memref<16x16xbf16, #tpu.memory_space<vmem>>, vector<16x16xbf16>
    %191 = arith.truncf %189 : vector<16x128xf32> to vector<16x128xbf16>
    %cst_131 = arith.constant dense<0.000000e+00> : vector<16x128xf32>
    %192 = tpu.matmul %190, %191, %cst_131 {dimension_numbers = #tpu.dot_dimension_numbers<[1], [0], [0], [1], [0, 0, 1, 1], [], []>} : vector<16x16xbf16>, vector<16x128xbf16>, vector<16x128xf32> -> vector<16x128xf32>
    %c0_132 = arith.constant 0 : index
    %c0_133 = arith.constant 0 : index
    %193 = vector.load %arg20[%c0_132, %c0_133] : memref<16x16xbf16, #tpu.memory_space<vmem>>, vector<16x16xbf16>
    %c0_134 = arith.constant 0 : index
    %c0_135 = arith.constant 0 : index
    %194 = vector.load %arg23[%c0_134, %c0_135] : memref<16x128xbf16, #tpu.memory_space<vmem>>, vector<16x128xbf16>
    %cst_136 = arith.constant dense<0.000000e+00> : vector<16x128xf32>
    %195 = tpu.matmul %193, %194, %cst_136 {dimension_numbers = #tpu.dot_dimension_numbers<[1], [0], [0], [1], [0, 0, 1, 1], [], []>} : vector<16x16xbf16>, vector<16x128xbf16>, vector<16x128xf32> -> vector<16x128xf32>
    %196 = arith.addf %192, %195 : vector<16x128xf32>
    %c0_137 = arith.constant 0 : index
    %c0_138 = arith.constant 0 : index
    %197 = vector.load %arg21[%c0_137, %c0_138] : memref<16x1xf32, #tpu.memory_space<vmem>>, vector<16x1xf32>
    %198 = vector.broadcast %197 : vector<16x1xf32> to vector<16x128xf32>
    %199 = arith.addf %196, %198 : vector<16x128xf32>
    %c0_139 = arith.constant 0 : index
    %c0_140 = arith.constant 0 : index
    %200 = vector.load %arg22[%c0_139, %c0_140] : memref<16x128xf32, #tpu.memory_space<vmem>>, vector<16x128xf32>
    tpu.vector_store %arg22[%c0_139, %c0_140], %199 {strides = array<i32>} : memref<16x128xf32, #tpu.memory_space<vmem>>, vector<16x128xf32>,
    return
  }
  func.func @transform_0(%arg0: i32) -> (i32, i32) {
    %c0_i32 = arith.constant 0 : i32
    %c0_i32_0 = arith.constant 0 : i32
    return %c0_i32, %arg0 : i32, i32
  }
  func.func @transform_1(%arg0: i32) -> (i32, i32) {
    %c0_i32 = arith.constant 0 : i32
    %c0_i32_0 = arith.constant 0 : i32
    return %c0_i32, %arg0 : i32, i32
  }
  func.func @transform_2(%arg0: i32) -> (i32, i32) {
    %c0_i32 = arith.constant 0 : i32
    %c0_i32_0 = arith.constant 0 : i32
    return %c0_i32, %arg0 : i32, i32
  }
  func.func @transform_3(%arg0: i32) -> (i32, i32, i32) {
    %c0_i32 = arith.constant 0 : i32
    %c0_i32_0 = arith.constant 0 : i32
    %c0_i32_1 = arith.constant 0 : i32
    %c0_i32_2 = arith.constant 0 : i32
    return %c0_i32, %c0_i32_0, %c0_i32_1 : i32, i32, i32
  }
  func.func @transform_4(%arg0: i32) -> (i32, i32, i32) {
    %c0_i32 = arith.constant 0 : i32
    %c0_i32_0 = arith.constant 0 : i32
    %c0_i32_1 = arith.constant 0 : i32
    %c0_i32_2 = arith.constant 0 : i32
    return %c0_i32, %c0_i32_0, %c0_i32_1 : i32, i32, i32
  }
  func.func @transform_5(%arg0: i32) -> (i32, i32, i32) {
    %c0_i32 = arith.constant 0 : i32
    %c0_i32_0 = arith.constant 0 : i32
    %c0_i32_1 = arith.constant 0 : i32
    %c0_i32_2 = arith.constant 0 : i32
    return %c0_i32, %c0_i32_0, %c0_i32_1 : i32, i32, i32
  }
  func.func @transform_6(%arg0: i32) -> (i32, i32, i32) {
    %c0_i32 = arith.constant 0 : i32
    %c0_i32_0 = arith.constant 0 : i32
    %c0_i32_1 = arith.constant 0 : i32
    %c0_i32_2 = arith.constant 0 : i32
    return %c0_i32, %c0_i32_0, %c0_i32_1 : i32, i32, i32
  }
  func.func @transform_7(%arg0: i32) -> (i32, i32, i32) {
    %c0_i32 = arith.constant 0 : i32
    %c0_i32_0 = arith.constant 0 : i32
    %c0_i32_1 = arith.constant 0 : i32
    %c0_i32_2 = arith.constant 0 : i32
    return %c0_i32, %c0_i32_0, %c0_i32_1 : i32, i32, i32
  }
  func.func @transform_8(%arg0: i32) -> (i32, i32, i32) {
    %c0_i32 = arith.constant 0 : i32
    %c0_i32_0 = arith.constant 0 : i32
    %c0_i32_1 = arith.constant 0 : i32
    %c0_i32_2 = arith.constant 0 : i32
    return %c0_i32, %c0_i32_0, %c0_i32_1 : i32, i32, i32
  }
  func.func @transform_9(%arg0: i32) -> (i32, i32) {
    %c0_i32 = arith.constant 0 : i32
    %c0_i32_0 = arith.constant 0 : i32
    %c0_i32_1 = arith.constant 0 : i32
    return %c0_i32, %c0_i32_0 : i32, i32
  }
  func.func @transform_10(%arg0: i32) -> (i32, i32) {
    %c0_i32 = arith.constant 0 : i32
    %c0_i32_0 = arith.constant 0 : i32
    %c0_i32_1 = arith.constant 0 : i32
    return %c0_i32, %c0_i32_0 : i32, i32
  }
  func.func @transform_11(%arg0: i32) -> (i32, i32) {
    %c0_i32 = arith.constant 0 : i32
    %c0_i32_0 = arith.constant 0 : i32
    %c0_i32_1 = arith.constant 0 : i32
    return %c0_i32, %c0_i32_0 : i32, i32
  }
  func.func @transform_12(%arg0: i32) -> (i32, i32) {
    %c0_i32 = arith.constant 0 : i32
    %c0_i32_0 = arith.constant 0 : i32
    %c0_i32_1 = arith.constant 0 : i32
    return %c0_i32, %c0_i32_0 : i32, i32
  }
  func.func @transform_13(%arg0: i32) -> (i32, i32) {
    %c0_i32 = arith.constant 0 : i32
    %c0_i32_0 = arith.constant 0 : i32
    %c0_i32_1 = arith.constant 0 : i32
    return %c0_i32, %c0_i32_0 : i32, i32
  }
  func.func @transform_14(%arg0: i32) -> (i32, i32) {
    %c0_i32 = arith.constant 0 : i32
    %c0_i32_0 = arith.constant 0 : i32
    %c0_i32_1 = arith.constant 0 : i32
    return %c0_i32, %c0_i32_0 : i32, i32
  }
  func.func @transform_15(%arg0: i32) -> (i32, i32) {
    %c0_i32 = arith.constant 0 : i32
    %c0_i32_0 = arith.constant 0 : i32
    %c0_i32_1 = arith.constant 0 : i32
    return %c0_i32, %c0_i32_0 : i32, i32
  }
  func.func @transform_16(%arg0: i32) -> (i32, i32) {
    %c0_i32 = arith.constant 0 : i32
    %c0_i32_0 = arith.constant 0 : i32
    %c0_i32_1 = arith.constant 0 : i32
    return %c0_i32, %c0_i32_0 : i32, i32
  }
  func.func @transform_17(%arg0: i32) -> (i32, i32) {
    %c0_i32 = arith.constant 0 : i32
    %c0_i32_0 = arith.constant 0 : i32
    %c0_i32_1 = arith.constant 0 : i32
    return %c0_i32, %c0_i32_0 : i32, i32
  }
  func.func @transform_18(%arg0: i32) -> (i32, i32) {
    %c0_i32 = arith.constant 0 : i32
    %c0_i32_0 = arith.constant 0 : i32
    %c0_i32_1 = arith.constant 0 : i32
    return %c0_i32, %c0_i32_0 : i32, i32
  }
  func.func @transform_19(%arg0: i32) -> (i32, i32) {
    %c0_i32 = arith.constant 0 : i32
    %c0_i32_0 = arith.constant 0 : i32
    %c0_i32_1 = arith.constant 0 : i32
    return %c0_i32, %c0_i32_0 : i32, i32
  }
  func.func @transform_20(%arg0: i32) -> (i32, i32) {
    %c0_i32 = arith.constant 0 : i32
    %c0_i32_0 = arith.constant 0 : i32
    %c0_i32_1 = arith.constant 0 : i32
    return %c0_i32, %c0_i32_0 : i32, i32
  }
  func.func @transform_21(%arg0: i32) -> (i32, i32) {
    %c0_i32 = arith.constant 0 : i32
    %c0_i32_0 = arith.constant 0 : i32
    return %c0_i32, %arg0 : i32, i32
  }
}

</mosaic_0001>

<llo_original>
// kernel: tpu_custom_call.1
$region0: #{tpu_custom_call.1}
  #allocation0 [shape = 'u32[]', space=smem, size = 0x4, offset = 0x4, fixed_abs, tag = 'smem constant byte address 0x4 - core index']
  #allocation1 [shape = 'u32[144,128]{1,0:T(1,128)}', space=vmem, size = 0x12000, scoped, tag = 'internal scratch']
  #allocation2 [shape = 'bf16[16,128]{1,0:T(8,128)(2,1)}', space=vmem, size = 0x1000, scoped, tag = 'scratch operand']
  %s0 = inlined_call_operand.vmem [shape: f32[16,128], index: 0, kind: input, shape index: {}]
  %s1 = inlined_call_operand.vmem [shape: f32[16,128], index: 1, kind: input, shape index: {}]
  %s2 = inlined_call_operand.vmem [shape: f32[16,128], index: 2, kind: input, shape index: {}]
  %s3 = inlined_call_operand.vmem [shape: f32[4,16,1], index: 3, kind: input, shape index: {}]
  %s4 = inlined_call_operand.vmem [shape: f32[4,16,1], index: 4, kind: input, shape index: {}]
  %s5 = inlined_call_operand.hbm [shape: bf16[4,128,128], index: 5, kind: input, shape index: {}]
  %s6 = inlined_call_operand.vmem [shape: f32[4,1,128], index: 6, kind: input, shape index: {}]
  %s7 = inlined_call_operand.hbm [shape: bf16[4,128,128], index: 7, kind: input, shape index: {}]
  %s8 = inlined_call_operand.vmem [shape: f32[4,1,128], index: 8, kind: input, shape index: {}]
  %s9 = inlined_call_operand.vmem [shape: bf16[2,16], index: 9, kind: input, shape index: {}]
  %s10 = inlined_call_operand.vmem [shape: f32[2,1], index: 10, kind: input, shape index: {}]
  %s11 = inlined_call_operand.vmem [shape: bf16[2,16], index: 11, kind: input, shape index: {}]
  %s12 = inlined_call_operand.vmem [shape: f32[2,1], index: 12, kind: input, shape index: {}]
  %s13 = inlined_call_operand.vmem [shape: bf16[16,16], index: 13, kind: input, shape index: {}]
  %s14 = inlined_call_operand.vmem [shape: f32[16,1], index: 14, kind: input, shape index: {}]
  %s15 = inlined_call_operand.vmem [shape: bf16[16,16], index: 15, kind: input, shape index: {}]
  %s16 = inlined_call_operand.vmem [shape: bf16[16,16], index: 16, kind: input, shape index: {}]
  %s17 = inlined_call_operand.vmem [shape: f32[16,1], index: 17, kind: input, shape index: {}]
  %s18 = inlined_call_operand.vmem [shape: bf16[16,16], index: 18, kind: input, shape index: {}]
  %s19 = inlined_call_operand.vmem [shape: bf16[16,16], index: 19, kind: input, shape index: {}]
  %s20 = inlined_call_operand.vmem [shape: f32[16,1], index: 20, kind: input, shape index: {}]
  %s21 = inlined_call_operand.hbm [shape: f32[16,128], index: 21, kind: output, shape index: {}]
  %s22 = sld [smem:[#allocation0]]
  $region102: #{tpu_custom_call.1} parent=0
    _
  %s24 = ssub.s32 1, %s22
  %s25 = scalar_select 0, %s24, %s22
  $region1: #{tpu_custom_call.1} parent=0
    #allocation3 [shape = 'u8[131072]{0}', space=vmem, size = 0x20000, scoped, tag = 'input window, operand 5, single buffered']
    #allocation4 [shape = 's32[1]{0}', space=sflag, size = 0x4, scoped, tag = 'scoped memory for tpu_custom_call.1']
    #allocation5 [shape = 's32[1]{0}', space=sflag, size = 0x4, scoped, tag = 'scoped memory for tpu_custom_call.1']
    #allocation6 [shape = 'u8[131072]{0}', space=vmem, size = 0x20000, scoped, tag = 'input window, operand 7, single buffered']
    #allocation7 [shape = 's32[1]{0}', space=sflag, size = 0x4, scoped, tag = 'scoped memory for tpu_custom_call.1']
    #allocation8 [shape = 'u8[8192]{0}', space=vmem, size = 0x2000, scoped, tag = 'output window, operand 0, single buffered']
    %26 = vsyncpa [#allocation4], 0
    %27 = vsyncpa [#allocation7], 0
    %28 = vsyncpa [#allocation5], 0
    // Predicated region
    $region2: #{tpu_custom_call.1} parent=1 // pred_check
      _
    $region3: #{tpu_custom_call.1} parent=1 // pred_check_branch
      %30 = sbr.rel (0) target = $region5
    $region4: #{tpu_custom_call.1} parent=1 // pred_region
      _
    $region5: #{tpu_custom_call.1} parent=1 // pred_fallthru
      _
    // Predicated region
    $region6: #{tpu_custom_call.1} parent=1 // pred_check
      _
    $region7: #{tpu_custom_call.1} parent=1 // pred_check_branch
      %32 = sbr.rel (0) target = $region9
    $region8: #{tpu_custom_call.1} parent=1 // pred_region
      _
    $region9: #{tpu_custom_call.1} parent=1 // pred_fallthru
      _
    // Predicated region
    $region10: #{tpu_custom_call.1} parent=1 // pred_check
      _
    $region11: #{tpu_custom_call.1} parent=1 // pred_check_branch
      %34 = sbr.rel (0) target = $region13
    $region12: #{tpu_custom_call.1} parent=1 // pred_region
      _
    $region13: #{tpu_custom_call.1} parent=1 // pred_fallthru
      _
    // Predicated region
    $region14: #{tpu_custom_call.1} parent=1 // pred_check
      _
    $region15: #{tpu_custom_call.1} parent=1 // pred_check_branch
      %36 = sbr.rel (0) target = $region17
    $region16: #{tpu_custom_call.1} parent=1 // pred_region
      _
    $region17: #{tpu_custom_call.1} parent=1 // pred_fallthru
      _
    // Predicated region
    $region18: #{tpu_custom_call.1} parent=1 // pred_check
      _
    $region19: #{tpu_custom_call.1} parent=1 // pred_check_branch
      %38 = sbr.rel (0) target = $region21
    $region20: #{tpu_custom_call.1} parent=1 // pred_region
      _
    $region21: #{tpu_custom_call.1} parent=1 // pred_fallthru
      _
    // Predicated region
    $region22: #{tpu_custom_call.1} parent=1 // pred_check
      _
    $region23: #{tpu_custom_call.1} parent=1 // pred_check_branch
      %40 = sbr.rel (0) target = $region25
    $region24: #{tpu_custom_call.1} parent=1 // pred_region
      %s42 = ssub.s32 4096, 4096
      %43 = vsyncadd [#allocation4], %s42
      %s44 = sshll.u32 [#allocation3], 4
      %s45 = int_to_ptr.vmem [resolvable:$true] %s44
      %50 = dma.hbm_to_vmem [thread:$0]  %s5, 4096, %s45, [#allocation4], 64, 64, 4
    $region25: #{tpu_custom_call.1} parent=1 // pred_fallthru
      _
    // Predicated region
    $region26: #{tpu_custom_call.1} parent=1 // pred_check
      _
    $region27: #{tpu_custom_call.1} parent=1 // pred_check_branch
      %52 = sbr.rel (0) target = $region29
    $region28: #{tpu_custom_call.1} parent=1 // pred_region
      _
    $region29: #{tpu_custom_call.1} parent=1 // pred_fallthru
      _
    // Predicated region
    $region30: #{tpu_custom_call.1} parent=1 // pred_check
      _
    $region31: #{tpu_custom_call.1} parent=1 // pred_check_branch
      %54 = sbr.rel (0) target = $region33
    $region32: #{tpu_custom_call.1} parent=1 // pred_region
      %s56 = ssub.s32 4096, 4096
      %57 = vsyncadd [#allocation7], %s56
      %s58 = sshll.u32 [#allocation6], 4
      %s59 = int_to_ptr.vmem [resolvable:$true] %s58
      %64 = dma.hbm_to_vmem [thread:$0]  %s7, 4096, %s59, [#allocation7], 64, 64, 4
    $region33: #{tpu_custom_call.1} parent=1 // pred_fallthru
      _
    // Predicated region
    $region34: #{tpu_custom_call.1} parent=1 // pred_check
      _
    $region35: #{tpu_custom_call.1} parent=1 // pred_check_branch
      %66 = sbr.rel (0) target = $region37
    $region36: #{tpu_custom_call.1} parent=1 // pred_region
      _
    $region37: #{tpu_custom_call.1} parent=1 // pred_fallthru
      _
    // Predicated region
    $region38: #{tpu_custom_call.1} parent=1 // pred_check
      _
    $region39: #{tpu_custom_call.1} parent=1 // pred_check_branch
      %68 = sbr.rel (0) target = $region41
    $region40: #{tpu_custom_call.1} parent=1 // pred_region
      _
    $region41: #{tpu_custom_call.1} parent=1 // pred_fallthru
      _
    // Predicated region
    $region42: #{tpu_custom_call.1} parent=1 // pred_check
      _
    $region43: #{tpu_custom_call.1} parent=1 // pred_check_branch
      %70 = sbr.rel (0) target = $region45
    $region44: #{tpu_custom_call.1} parent=1 // pred_region
      _
    $region45: #{tpu_custom_call.1} parent=1 // pred_fallthru
      _
    // Predicated region
    $region46: #{tpu_custom_call.1} parent=1 // pred_check
      _
    $region47: #{tpu_custom_call.1} parent=1 // pred_check_branch
      %72 = sbr.rel (0) target = $region49
    $region48: #{tpu_custom_call.1} parent=1 // pred_region
      _
    $region49: #{tpu_custom_call.1} parent=1 // pred_fallthru
      _
    // Predicated region
    $region50: #{tpu_custom_call.1} parent=1 // pred_check
      _
    $region51: #{tpu_custom_call.1} parent=1 // pred_check_branch
      %74 = sbr.rel (0) target = $region53
    $region52: #{tpu_custom_call.1} parent=1 // pred_region
      _
    $region53: #{tpu_custom_call.1} parent=1 // pred_fallthru
      _
    // Predicated region
    $region54: #{tpu_custom_call.1} parent=1 // pred_check
      _
    $region55: #{tpu_custom_call.1} parent=1 // pred_check_branch
      %76 = sbr.rel (0) target = $region57
    $region56: #{tpu_custom_call.1} parent=1 // pred_region
      _
    $region57: #{tpu_custom_call.1} parent=1 // pred_fallthru
      _
    // Predicated region
    $region58: #{tpu_custom_call.1} parent=1 // pred_check
      _
    $region59: #{tpu_custom_call.1} parent=1 // pred_check_branch
      %78 = sbr.rel (0) target = $region61
    $region60: #{tpu_custom_call.1} parent=1 // pred_region
      _
    $region61: #{tpu_custom_call.1} parent=1 // pred_fallthru
      _
    // Predicated region
    $region62: #{tpu_custom_call.1} parent=1 // pred_check
      _
    $region63: #{tpu_custom_call.1} parent=1 // pred_check_branch
      %80 = sbr.rel (0) target = $region65
    $region64: #{tpu_custom_call.1} parent=1 // pred_region
      _
    $region65: #{tpu_custom_call.1} parent=1 // pred_fallthru
      _
    // Predicated region
    $region66: #{tpu_custom_call.1} parent=1 // pred_check
      _
    $region67: #{tpu_custom_call.1} parent=1 // pred_check_branch
      %82 = sbr.rel (0) target = $region69
    $region68: #{tpu_custom_call.1} parent=1 // pred_region
      _
    $region69: #{tpu_custom_call.1} parent=1 // pred_fallthru
      _
    // Predicated region
    $region70: #{tpu_custom_call.1} parent=1 // pred_check
      _
    $region71: #{tpu_custom_call.1} parent=1 // pred_check_branch
      %84 = sbr.rel (0) target = $region73
    $region72: #{tpu_custom_call.1} parent=1 // pred_region
      _
    $region73: #{tpu_custom_call.1} parent=1 // pred_fallthru
      _
    // Predicated region
    $region74: #{tpu_custom_call.1} parent=1 // pred_check
      _
    $region75: #{tpu_custom_call.1} parent=1 // pred_check_branch
      %86 = sbr.rel (0) target = $region77
    $region76: #{tpu_custom_call.1} parent=1 // pred_region
      _
    $region77: #{tpu_custom_call.1} parent=1 // pred_fallthru
      _
    // Predicated region
    $region78: #{tpu_custom_call.1} parent=1 // pred_check
      _
    $region79: #{tpu_custom_call.1} parent=1 // pred_check_branch
      %88 = sbr.rel (0) target = $region81
    $region80: #{tpu_custom_call.1} parent=1 // pred_region
      _
    $region81: #{tpu_custom_call.1} parent=1 // pred_fallthru
      _
    // Predicated region
    $region82: #{tpu_custom_call.1} parent=1 // pred_check
      _
    $region83: #{tpu_custom_call.1} parent=1 // pred_check_branch
      %90 = sbr.rel (0) target = $region85
    $region84: #{tpu_custom_call.1} parent=1 // pred_region
      _
    $region85: #{tpu_custom_call.1} parent=1 // pred_fallthru
      _
    // Predicated region
    $region86: #{tpu_custom_call.1} parent=1 // pred_check
      _
    $region87: #{tpu_custom_call.1} parent=1 // pred_check_branch
      %92 = sbr.rel (0) target = $region89
    $region88: #{tpu_custom_call.1} parent=1 // pred_region
      %93 = dma.done [#allocation4], 4096
    $region89: #{tpu_custom_call.1} parent=1 // pred_fallthru
      _
    // Predicated region
    $region90: #{tpu_custom_call.1} parent=1 // pred_check
      _
    $region91: #{tpu_custom_call.1} parent=1 // pred_check_branch
      %95 = sbr.rel (0) target = $region93
    $region92: #{tpu_custom_call.1} parent=1 // pred_region
      %96 = dma.done [#allocation7], 4096
    $region93: #{tpu_custom_call.1} parent=1 // pred_fallthru
      _
    %v98 = vld [vmem:[%s0] sm:$0xff]
    %v99 = vld [vmem:[%s0 + $0x8] sm:$0xff]
    %v100 = vld [vmem:[%s3] sm:$0xff]
    %v101 = vld [vmem:[%s3 + $0x8] sm:$0xff]
    %103 = vset.pattern.permute.xlu0 0
    %104 = vperm.xlu0 %103, %v100
    %v105 = vpop.permute.xlu0 %104
    %108 = vset.pattern.permute.xlu0 0
    %109 = vperm.xlu0 %108, %v101
    %v110 = vpop.permute.xlu0 %109
    %v112 = vmul.f32 %v98, %v105
    %v113 = vmul.f32 %v99, %v110
    %v114 = vld [vmem:[%s4] sm:$0xff]
    %v115 = vld [vmem:[%s4 + $0x8] sm:$0xff]
    %117 = vset.pattern.permute.xlu0 0
    %118 = vperm.xlu0 %117, %v114
    %v119 = vpop.permute.xlu0 %118
    %122 = vset.pattern.permute.xlu0 0
    %123 = vperm.xlu0 %122, %v115
    %v124 = vpop.permute.xlu0 %123
    %v126 = vadd.f32 %v112, %v119
    %v127 = vadd.f32 %v113, %v124
    %v128 = vpack.c.bf16 %v127, %v126
    %v129 = vld [vmem:[#allocation3] sm:$0xf]
    %v130 = vld [vmem:[#allocation3 + $0x4] sm:$0xf]
    %v131 = vld [vmem:[#allocation3 + $0x8] sm:$0xf]
    %v132 = vld [vmem:[#allocation3 + $0xc] sm:$0xf]
    %v133 = vld [vmem:[#allocation3 + $0x10] sm:$0xf]
    %v134 = vld [vmem:[#allocation3 + $0x14] sm:$0xf]
    %v135 = vld [vmem:[#allocation3 + $0x18] sm:$0xf]
    %v136 = vld [vmem:[#allocation3 + $0x1c] sm:$0xf]
    %v137 = vld [vmem:[#allocation3 + $0x20] sm:$0xf]
    %v138 = vld [vmem:[#allocation3 + $0x24] sm:$0xf]
    %v139 = vld [vmem:[#allocation3 + $0x28] sm:$0xf]
    %v140 = vld [vmem:[#allocation3 + $0x2c] sm:$0xf]
    %v141 = vld [vmem:[#allocation3 + $0x30] sm:$0xf]
    %v142 = vld [vmem:[#allocation3 + $0x34] sm:$0xf]
    %v143 = vld [vmem:[#allocation3 + $0x38] sm:$0xf]
    %v144 = vld [vmem:[#allocation3 + $0x3c] sm:$0xf]
    %v145 = vld [vmem:[%s6] sm:$0x1]
    %v147 = vlaneseq
    %v148 = vshrl.u32 %v147, 7
    %v149 = vsub.s32 0, %v148
    %v150 = vrot.slane %v145, %v149
    %v168 = vunpack.c.l.b16 %v129
    %v169 = vunpack.c.l.b16 %v130
    %v170 = vunpack.c.l.b16 %v131
    %v171 = vunpack.c.l.b16 %v132
    %v172 = vunpack.c.l.b16 %v133
    %v173 = vunpack.c.l.b16 %v134
    %v174 = vunpack.c.l.b16 %v135
    %v175 = vunpack.c.l.b16 %v136
    %v176 = vunpack.c.l.b16 %v137
    %v177 = vunpack.c.l.b16 %v138
    %v178 = vunpack.c.l.b16 %v139
    %v179 = vunpack.c.l.b16 %v140
    %v180 = vunpack.c.l.b16 %v141
    %v181 = vunpack.c.l.b16 %v142
    %v182 = vunpack.c.l.b16 %v143
    %v183 = vunpack.c.l.b16 %v144
    %v184 = vpack.c.b16 %v169, %v168
    %v185 = vpack.c.b16 %v171, %v170
    %v186 = vpack.c.b16 %v173, %v172
    %v187 = vpack.c.b16 %v175, %v174
    %v188 = vpack.c.b16 %v177, %v176
    %v189 = vpack.c.b16 %v179, %v178
    %v190 = vpack.c.b16 %v181, %v180
    %v191 = vpack.c.b16 %v183, %v182
    %200 = vmatprep.subr.bf16.mxu0 0
    %201 = vmatpush1.bf16.msra.mxu0 %v191
    %202 = vmatprep.subr.bf16.mxu0 0
    %203 = vmatpush1.bf16.msra.mxu0 %v190
    %204 = vmatprep.subr.bf16.mxu0 0
    %205 = vmatpush1.bf16.msra.mxu0 %v189
    %206 = vmatprep.subr.bf16.mxu0 0
    %207 = vmatpush1.bf16.msra.mxu0 %v188
    %208 = vmatprep.subr.bf16.mxu0 0
    %209 = vmatpush1.bf16.msra.mxu0 %v187
    %210 = vmatprep.subr.bf16.mxu0 0
    %211 = vmatpush1.bf16.msra.mxu0 %v186
    %212 = vmatprep.subr.bf16.mxu0 0
    %213 = vmatpush1.bf16.msra.mxu0 %v185
    %214 = vmatprep.subr.bf16.mxu0 0
    %215 = vmatpush1.bf16.msra.mxu0 %v184
    %216 = vmatprep.subr.bf16.mxu0 0
    %217 = vmatpush2.bf16.msra.mxu0 0
    %218 = vmatprep.subr.bf16.mxu0 0
    %219 = vmatpush2.bf16.msra.mxu0 0
    %220 = vmatprep.subr.bf16.mxu0 0
    %221 = vmatpush2.bf16.msra.mxu0 0
    %222 = vmatprep.subr.bf16.mxu0 0
    %223 = vmatpush2.bf16.msra.mxu0 0
    %224 = vmatprep.subr.bf16.mxu0 0
    %225 = vmatpush2.bf16.msra.mxu0 0
    %226 = vmatprep.subr.bf16.mxu0 0
    %227 = vmatpush2.bf16.msra.mxu0 0
    %228 = vmatprep.subr.bf16.mxu0 0
    %229 = vmatpush2.bf16.msra.mxu0 0
    %230 = vmatprep.subr.bf16.mxu0 0
    %231 = vmatpush2.bf16.msra.mxu0 0
    %232 = vmatprep.mubr.bf16.mxu0 0
    %233 = vmatmul.mubr.bf16.gmra.mxu0 %v128
    %v234 = vpop.f32.mrf.mxu0
    %v235 = vadd.f32 %v150, %v234
    %v236 = vpop.f32.mrf.mxu0
    %v237 = vpop.f32.mrf.mxu0
    %v238 = vadd.f32 %v150, %v237
    %v239 = vpop.f32.mrf.mxu0
    %240 = vdwg.mxu0
    %v241 = vmax.f32 %v235, 0.0
    %v242 = vmax.f32 %v238, 0.0
    %v243 = vpack.c.bf16 %v242, %v241
    %v244 = vld [vmem:[#allocation6] sm:$0xf]
    %v245 = vld [vmem:[#allocation6 + $0x4] sm:$0xf]
    %v246 = vld [vmem:[#allocation6 + $0x8] sm:$0xf]
    %v247 = vld [vmem:[#allocation6 + $0xc] sm:$0xf]
    %v248 = vld [vmem:[#allocation6 + $0x10] sm:$0xf]
    %v249 = vld [vmem:[#allocation6 + $0x14] sm:$0xf]
    %v250 = vld [vmem:[#allocation6 + $0x18] sm:$0xf]
    %v251 = vld [vmem:[#allocation6 + $0x1c] sm:$0xf]
    %v252 = vld [vmem:[#allocation6 + $0x20] sm:$0xf]
    %v253 = vld [vmem:[#allocation6 + $0x24] sm:$0xf]
    %v254 = vld [vmem:[#allocation6 + $0x28] sm:$0xf]
    %v255 = vld [vmem:[#allocation6 + $0x2c] sm:$0xf]
    %v256 = vld [vmem:[#allocation6 + $0x30] sm:$0xf]
    %v257 = vld [vmem:[#allocation6 + $0x34] sm:$0xf]
    %v258 = vld [vmem:[#allocation6 + $0x38] sm:$0xf]
    %v259 = vld [vmem:[#allocation6 + $0x3c] sm:$0xf]
    %v260 = vld [vmem:[%s8] sm:$0x1]
    %v262 = vlaneseq
    %v263 = vshrl.u32 %v262, 7
    %v264 = vsub.s32 0, %v263
    %v265 = vrot.slane %v260, %v264
    %v283 = vunpack.c.l.b16 %v244
    %v284 = vunpack.c.l.b16 %v245
    %v285 = vunpack.c.l.b16 %v246
    %v286 = vunpack.c.l.b16 %v247
    %v287 = vunpack.c.l.b16 %v248
    %v288 = vunpack.c.l.b16 %v249
    %v289 = vunpack.c.l.b16 %v250
    %v290 = vunpack.c.l.b16 %v251
    %v291 = vunpack.c.l.b16 %v252
    %v292 = vunpack.c.l.b16 %v253
    %v293 = vunpack.c.l.b16 %v254
    %v294 = vunpack.c.l.b16 %v255
    %v295 = vunpack.c.l.b16 %v256
    %v296 = vunpack.c.l.b16 %v257
    %v297 = vunpack.c.l.b16 %v258
    %v298 = vunpack.c.l.b16 %v259
    %v299 = vpack.c.b16 %v284, %v283
    %v300 = vpack.c.b16 %v286, %v285
    %v301 = vpack.c.b16 %v288, %v287
    %v302 = vpack.c.b16 %v290, %v289
    %v303 = vpack.c.b16 %v292, %v291
    %v304 = vpack.c.b16 %v294, %v293
    %v305 = vpack.c.b16 %v296, %v295
    %v306 = vpack.c.b16 %v298, %v297
    %315 = vmatprep.subr.bf16.mxu0 0
    %316 = vmatpush1.bf16.msra.mxu0 %v306
    %317 = vmatprep.subr.bf16.mxu0 0
    %318 = vmatpush1.bf16.msra.mxu0 %v305
    %319 = vmatprep.subr.bf16.mxu0 0
    %320 = vmatpush1.bf16.msra.mxu0 %v304
    %321 = vmatprep.subr.bf16.mxu0 0
    %322 = vmatpush1.bf16.msra.mxu0 %v303
    %323 = vmatprep.subr.bf16.mxu0 0
    %324 = vmatpush1.bf16.msra.mxu0 %v302
    %325 = vmatprep.subr.bf16.mxu0 0
    %326 = vmatpush1.bf16.msra.mxu0 %v301
    %327 = vmatprep.subr.bf16.mxu0 0
    %328 = vmatpush1.bf16.msra.mxu0 %v300
    %329 = vmatprep.subr.bf16.mxu0 0
    %330 = vmatpush1.bf16.msra.mxu0 %v299
    %331 = vmatprep.subr.bf16.mxu0 0
    %332 = vmatpush2.bf16.msra.mxu0 0
    %333 = vmatprep.subr.bf16.mxu0 0
    %334 = vmatpush2.bf16.msra.mxu0 0
    %335 = vmatprep.subr.bf16.mxu0 0
    %336 = vmatpush2.bf16.msra.mxu0 0
    %337 = vmatprep.subr.bf16.mxu0 0
    %338 = vmatpush2.bf16.msra.mxu0 0
    %339 = vmatprep.subr.bf16.mxu0 0
    %340 = vmatpush2.bf16.msra.mxu0 0
    %341 = vmatprep.subr.bf16.mxu0 0
    %342 = vmatpush2.bf16.msra.mxu0 0
    %343 = vmatprep.subr.bf16.mxu0 0
    %344 = vmatpush2.bf16.msra.mxu0 0
    %345 = vmatprep.subr.bf16.mxu0 0
    %346 = vmatpush2.bf16.msra.mxu0 0
    %347 = vmatprep.mubr.bf16.mxu0 0
    %348 = vmatmul.mubr.bf16.gmra.mxu0 %v243
    %v349 = vpop.f32.mrf.mxu0
    %v350 = vadd.f32 %v265, %v349
    %v351 = vpop.f32.mrf.mxu0
    %v352 = vpop.f32.mrf.mxu0
    %v353 = vadd.f32 %v265, %v352
    %v354 = vpop.f32.mrf.mxu0
    %355 = vdwg.mxu0
    %v356 = vmax.f32 %v350, 0.0
    %v357 = vmax.f32 %v353, 0.0
    %v358 = vld [vmem:[%s1] sm:$0xff]
    %v359 = vld [vmem:[%s1 + $0x8] sm:$0xff]
    %s360 = scalar_lea.vmem %s3, 16
    %v361 = vld [vmem:[%s360] sm:$0xff]
    %v362 = vld [vmem:[%s360 + $0x8] sm:$0xff]
    %364 = vset.pattern.permute.xlu0 0
    %365 = vperm.xlu0 %364, %v361
    %v366 = vpop.permute.xlu0 %365
    %369 = vset.pattern.permute.xlu0 0
    %370 = vperm.xlu0 %369, %v362
    %v371 = vpop.permute.xlu0 %370
    %v373 = vmul.f32 %v358, %v366
    %v374 = vmul.f32 %v359, %v371
    %s375 = scalar_lea.vmem %s4, 16
    %v376 = vld [vmem:[%s375] sm:$0xff]
    %v377 = vld [vmem:[%s375 + $0x8] sm:$0xff]
    %379 = vset.pattern.permute.xlu0 0
    %380 = vperm.xlu0 %379, %v376
    %v381 = vpop.permute.xlu0 %380
    %384 = vset.pattern.permute.xlu0 0
    %385 = vperm.xlu0 %384, %v377
    %v386 = vpop.permute.xlu0 %385
    %v388 = vadd.f32 %v373, %v381
    %v389 = vadd.f32 %v374, %v386
    %v390 = vpack.c.bf16 %v389, %v388
    %s391 = scalar_lea.vmem [#allocation3], 64
    %v392 = vld [vmem:[%s391] sm:$0xf]
    %v393 = vld [vmem:[%s391 + $0x4] sm:$0xf]
    %v394 = vld [vmem:[%s391 + $0x8] sm:$0xf]
    %v395 = vld [vmem:[%s391 + $0xc] sm:$0xf]
    %v396 = vld [vmem:[%s391 + $0x10] sm:$0xf]
    %v397 = vld [vmem:[%s391 + $0x14] sm:$0xf]
    %v398 = vld [vmem:[%s391 + $0x18] sm:$0xf]
    %v399 = vld [vmem:[%s391 + $0x1c] sm:$0xf]
    %v400 = vld [vmem:[%s391 + $0x20] sm:$0xf]
    %v401 = vld [vmem:[%s391 + $0x24] sm:$0xf]
    %v402 = vld [vmem:[%s391 + $0x28] sm:$0xf]
    %v403 = vld [vmem:[%s391 + $0x2c] sm:$0xf]
    %v404 = vld [vmem:[%s391 + $0x30] sm:$0xf]
    %v405 = vld [vmem:[%s391 + $0x34] sm:$0xf]
    %v406 = vld [vmem:[%s391 + $0x38] sm:$0xf]
    %v407 = vld [vmem:[%s391 + $0x3c] sm:$0xf]
    %s408 = scalar_lea.vmem %s6, 1
    %v409 = vld [vmem:[%s408] sm:$0x1]
    %v411 = vlaneseq
    %v412 = vshrl.u32 %v411, 7
    %v413 = vsub.s32 0, %v412
    %v414 = vrot.slane %v409, %v413
    %v432 = vunpack.c.l.b16 %v392
    %v433 = vunpack.c.l.b16 %v393
    %v434 = vunpack.c.l.b16 %v394
    %v435 = vunpack.c.l.b16 %v395
    %v436 = vunpack.c.l.b16 %v396
    %v437 = vunpack.c.l.b16 %v397
    %v438 = vunpack.c.l.b16 %v398
    %v439 = vunpack.c.l.b16 %v399
    %v440 = vunpack.c.l.b16 %v400
    %v441 = vunpack.c.l.b16 %v401
    %v442 = vunpack.c.l.b16 %v402
    %v443 = vunpack.c.l.b16 %v403
    %v444 = vunpack.c.l.b16 %v404
    %v445 = vunpack.c.l.b16 %v405
    %v446 = vunpack.c.l.b16 %v406
    %v447 = vunpack.c.l.b16 %v407
    %v448 = vpack.c.b16 %v433, %v432
    %v449 = vpack.c.b16 %v435, %v434
    %v450 = vpack.c.b16 %v437, %v436
    %v451 = vpack.c.b16 %v439, %v438
    %v452 = vpack.c.b16 %v441, %v440
    %v453 = vpack.c.b16 %v443, %v442
    %v454 = vpack.c.b16 %v445, %v444
    %v455 = vpack.c.b16 %v447, %v446
    %464 = vmatprep.subr.bf16.mxu0 0
    %465 = vmatpush1.bf16.msra.mxu0 %v455
    %466 = vmatprep.subr.bf16.mxu0 0
    %467 = vmatpush1.bf16.msra.mxu0 %v454
    %468 = vmatprep.subr.bf16.mxu0 0
    %469 = vmatpush1.bf16.msra.mxu0 %v453
    %470 = vmatprep.subr.bf16.mxu0 0
    %471 = vmatpush1.bf16.msra.mxu0 %v452
    %472 = vmatprep.subr.bf16.mxu0 0
    %473 = vmatpush1.bf16.msra.mxu0 %v451
    %474 = vmatprep.subr.bf16.mxu0 0
    %475 = vmatpush1.bf16.msra.mxu0 %v450
    %476 = vmatprep.subr.bf16.mxu0 0
    %477 = vmatpush1.bf16.msra.mxu0 %v449
    %478 = vmatprep.subr.bf16.mxu0 0
    %479 = vmatpush1.bf16.msra.mxu0 %v448
    %480 = vmatprep.subr.bf16.mxu0 0
    %481 = vmatpush2.bf16.msra.mxu0 0
    %482 = vmatprep.subr.bf16.mxu0 0
    %483 = vmatpush2.bf16.msra.mxu0 0
    %484 = vmatprep.subr.bf16.mxu0 0
    %485 = vmatpush2.bf16.msra.mxu0 0
    %486 = vmatprep.subr.bf16.mxu0 0
    %487 = vmatpush2.bf16.msra.mxu0 0
    %488 = vmatprep.subr.bf16.mxu0 0
    %489 = vmatpush2.bf16.msra.mxu0 0
    %490 = vmatprep.subr.bf16.mxu0 0
    %491 = vmatpush2.bf16.msra.mxu0 0
    %492 = vmatprep.subr.bf16.mxu0 0
    %493 = vmatpush2.bf16.msra.mxu0 0
    %494 = vmatprep.subr.bf16.mxu0 0
    %495 = vmatpush2.bf16.msra.mxu0 0
    %496 = vmatprep.mubr.bf16.mxu0 0
    %497 = vmatmul.mubr.bf16.gmra.mxu0 %v390
    %v498 = vpop.f32.mrf.mxu0
    %v499 = vadd.f32 %v414, %v498
    %v500 = vpop.f32.mrf.mxu0
    %v501 = vpop.f32.mrf.mxu0
    %v502 = vadd.f32 %v414, %v501
    %v503 = vpop.f32.mrf.mxu0
    %504 = vdwg.mxu0
    %v505 = vmax.f32 %v499, 0.0
    %v506 = vmax.f32 %v502, 0.0
    %v507 = vpack.c.bf16 %v506, %v505
    %s508 = scalar_lea.vmem [#allocation6], 64
    %v509 = vld [vmem:[%s508] sm:$0xf]
    %v510 = vld [vmem:[%s508 + $0x4] sm:$0xf]
    %v511 = vld [vmem:[%s508 + $0x8] sm:$0xf]
    %v512 = vld [vmem:[%s508 + $0xc] sm:$0xf]
    %v513 = vld [vmem:[%s508 + $0x10] sm:$0xf]
    %v514 = vld [vmem:[%s508 + $0x14] sm:$0xf]
    %v515 = vld [vmem:[%s508 + $0x18] sm:$0xf]
    %v516 = vld [vmem:[%s508 + $0x1c] sm:$0xf]
    %v517 = vld [vmem:[%s508 + $0x20] sm:$0xf]
    %v518 = vld [vmem:[%s508 + $0x24] sm:$0xf]
    %v519 = vld [vmem:[%s508 + $0x28] sm:$0xf]
    %v520 = vld [vmem:[%s508 + $0x2c] sm:$0xf]
    %v521 = vld [vmem:[%s508 + $0x30] sm:$0xf]
    %v522 = vld [vmem:[%s508 + $0x34] sm:$0xf]
    %v523 = vld [vmem:[%s508 + $0x38] sm:$0xf]
    %v524 = vld [vmem:[%s508 + $0x3c] sm:$0xf]
    %s525 = scalar_lea.vmem %s8, 1
    %v526 = vld [vmem:[%s525] sm:$0x1]
    %v528 = vlaneseq
    %v529 = vshrl.u32 %v528, 7
    %v530 = vsub.s32 0, %v529
    %v531 = vrot.slane %v526, %v530
    %v549 = vunpack.c.l.b16 %v509
    %v550 = vunpack.c.l.b16 %v510
    %v551 = vunpack.c.l.b16 %v511
    %v552 = vunpack.c.l.b16 %v512
    %v553 = vunpack.c.l.b16 %v513
    %v554 = vunpack.c.l.b16 %v514
    %v555 = vunpack.c.l.b16 %v515
    %v556 = vunpack.c.l.b16 %v516
    %v557 = vunpack.c.l.b16 %v517
    %v558 = vunpack.c.l.b16 %v518
    %v559 = vunpack.c.l.b16 %v519
    %v560 = vunpack.c.l.b16 %v520
    %v561 = vunpack.c.l.b16 %v521
    %v562 = vunpack.c.l.b16 %v522
    %v563 = vunpack.c.l.b16 %v523
    %v564 = vunpack.c.l.b16 %v524
    %v565 = vpack.c.b16 %v550, %v549
    %v566 = vpack.c.b16 %v552, %v551
    %v567 = vpack.c.b16 %v554, %v553
    %v568 = vpack.c.b16 %v556, %v555
    %v569 = vpack.c.b16 %v558, %v557
    %v570 = vpack.c.b16 %v560, %v559
    %v571 = vpack.c.b16 %v562, %v561
    %v572 = vpack.c.b16 %v564, %v563
    %581 = vmatprep.subr.bf16.mxu0 0
    %582 = vmatpush1.bf16.msra.mxu0 %v572
    %583 = vmatprep.subr.bf16.mxu0 0
    %584 = vmatpush1.bf16.msra.mxu0 %v571
    %585 = vmatprep.subr.bf16.mxu0 0
    %586 = vmatpush1.bf16.msra.mxu0 %v570
    %587 = vmatprep.subr.bf16.mxu0 0
    %588 = vmatpush1.bf16.msra.mxu0 %v569
    %589 = vmatprep.subr.bf16.mxu0 0
    %590 = vmatpush1.bf16.msra.mxu0 %v568
    %591 = vmatprep.subr.bf16.mxu0 0
    %592 = vmatpush1.bf16.msra.mxu0 %v567
    %593 = vmatprep.subr.bf16.mxu0 0
    %594 = vmatpush1.bf16.msra.mxu0 %v566
    %595 = vmatprep.subr.bf16.mxu0 0
    %596 = vmatpush1.bf16.msra.mxu0 %v565
    %597 = vmatprep.subr.bf16.mxu0 0
    %598 = vmatpush2.bf16.msra.mxu0 0
    %599 = vmatprep.subr.bf16.mxu0 0
    %600 = vmatpush2.bf16.msra.mxu0 0
    %601 = vmatprep.subr.bf16.mxu0 0
    %602 = vmatpush2.bf16.msra.mxu0 0
    %603 = vmatprep.subr.bf16.mxu0 0
    %604 = vmatpush2.bf16.msra.mxu0 0
    %605 = vmatprep.subr.bf16.mxu0 0
    %606 = vmatpush2.bf16.msra.mxu0 0
    %607 = vmatprep.subr.bf16.mxu0 0
    %608 = vmatpush2.bf16.msra.mxu0 0
    %609 = vmatprep.subr.bf16.mxu0 0
    %610 = vmatpush2.bf16.msra.mxu0 0
    %611 = vmatprep.subr.bf16.mxu0 0
    %612 = vmatpush2.bf16.msra.mxu0 0
    %613 = vmatprep.mubr.bf16.mxu0 0
    %614 = vmatmul.mubr.bf16.gmra.mxu0 %v507
    %v615 = vpop.f32.mrf.mxu0
    %v616 = vadd.f32 %v531, %v615
    %v617 = vpop.f32.mrf.mxu0
    %v618 = vpop.f32.mrf.mxu0
    %v619 = vadd.f32 %v531, %v618
    %v620 = vpop.f32.mrf.mxu0
    %621 = vdwg.mxu0
    %v622 = vmax.f32 %v616, 0.0
    %v623 = vmax.f32 %v619, 0.0
    %v624 = vld [vmem:[%s2] sm:$0xff]
    %v625 = vld [vmem:[%s2 + $0x8] sm:$0xff]
    %s626 = scalar_lea.vmem %s3, 32
    %v627 = vld [vmem:[%s626] sm:$0xff]
    %v628 = vld [vmem:[%s626 + $0x8] sm:$0xff]
    %630 = vset.pattern.permute.xlu0 0
    %631 = vperm.xlu0 %630, %v627
    %v632 = vpop.permute.xlu0 %631
    %635 = vset.pattern.permute.xlu0 0
    %636 = vperm.xlu0 %635, %v628
    %v637 = vpop.permute.xlu0 %636
    %v639 = vmul.f32 %v624, %v632
    %v640 = vmul.f32 %v625, %v637
    %s641 = scalar_lea.vmem %s4, 32
    %v642 = vld [vmem:[%s641] sm:$0xff]
    %v643 = vld [vmem:[%s641 + $0x8] sm:$0xff]
    %645 = vset.pattern.permute.xlu0 0
    %646 = vperm.xlu0 %645, %v642
    %v647 = vpop.permute.xlu0 %646
    %650 = vset.pattern.permute.xlu0 0
    %651 = vperm.xlu0 %650, %v643
    %v652 = vpop.permute.xlu0 %651
    %v654 = vadd.f32 %v639, %v647
    %v655 = vadd.f32 %v640, %v652
    %v656 = vpack.c.bf16 %v655, %v654
    %s657 = scalar_lea.vmem [#allocation3], 128
    %v658 = vld [vmem:[%s657] sm:$0xf]
    %v659 = vld [vmem:[%s657 + $0x4] sm:$0xf]
    %v660 = vld [vmem:[%s657 + $0x8] sm:$0xf]
    %v661 = vld [vmem:[%s657 + $0xc] sm:$0xf]
    %v662 = vld [vmem:[%s657 + $0x10] sm:$0xf]
    %v663 = vld [vmem:[%s657 + $0x14] sm:$0xf]
    %v664 = vld [vmem:[%s657 + $0x18] sm:$0xf]
    %v665 = vld [vmem:[%s657 + $0x1c] sm:$0xf]
    %v666 = vld [vmem:[%s657 + $0x20] sm:$0xf]
    %v667 = vld [vmem:[%s657 + $0x24] sm:$0xf]
    %v668 = vld [vmem:[%s657 + $0x28] sm:$0xf]
    %v669 = vld [vmem:[%s657 + $0x2c] sm:$0xf]
    %v670 = vld [vmem:[%s657 + $0x30] sm:$0xf]
    %v671 = vld [vmem:[%s657 + $0x34] sm:$0xf]
    %v672 = vld [vmem:[%s657 + $0x38] sm:$0xf]
    %v673 = vld [vmem:[%s657 + $0x3c] sm:$0xf]
    %s674 = scalar_lea.vmem %s6, 2
    %v675 = vld [vmem:[%s674] sm:$0x1]
    %v677 = vlaneseq
    %v678 = vshrl.u32 %v677, 7
    %v679 = vsub.s32 0, %v678
    %v680 = vrot.slane %v675, %v679
    %v698 = vunpack.c.l.b16 %v658
    %v699 = vunpack.c.l.b16 %v659
    %v700 = vunpack.c.l.b16 %v660
    %v701 = vunpack.c.l.b16 %v661
    %v702 = vunpack.c.l.b16 %v662
    %v703 = vunpack.c.l.b16 %v663
    %v704 = vunpack.c.l.b16 %v664
    %v705 = vunpack.c.l.b16 %v665
    %v706 = vunpack.c.l.b16 %v666
    %v707 = vunpack.c.l.b16 %v667
    %v708 = vunpack.c.l.b16 %v668
    %v709 = vunpack.c.l.b16 %v669
    %v710 = vunpack.c.l.b16 %v670
    %v711 = vunpack.c.l.b16 %v671
    %v712 = vunpack.c.l.b16 %v672
    %v713 = vunpack.c.l.b16 %v673
    %v714 = vpack.c.b16 %v699, %v698
    %v715 = vpack.c.b16 %v701, %v700
    %v716 = vpack.c.b16 %v703, %v702
    %v717 = vpack.c.b16 %v705, %v704
    %v718 = vpack.c.b16 %v707, %v706
    %v719 = vpack.c.b16 %v709, %v708
    %v720 = vpack.c.b16 %v711, %v710
    %v721 = vpack.c.b16 %v713, %v712
    %730 = vmatprep.subr.bf16.mxu0 0
    %731 = vmatpush1.bf16.msra.mxu0 %v721
    %732 = vmatprep.subr.bf16.mxu0 0
    %733 = vmatpush1.bf16.msra.mxu0 %v720
    %734 = vmatprep.subr.bf16.mxu0 0
    %735 = vmatpush1.bf16.msra.mxu0 %v719
    %736 = vmatprep.subr.bf16.mxu0 0
    %737 = vmatpush1.bf16.msra.mxu0 %v718
    %738 = vmatprep.subr.bf16.mxu0 0
    %739 = vmatpush1.bf16.msra.mxu0 %v717
    %740 = vmatprep.subr.bf16.mxu0 0
    %741 = vmatpush1.bf16.msra.mxu0 %v716
    %742 = vmatprep.subr.bf16.mxu0 0
    %743 = vmatpush1.bf16.msra.mxu0 %v715
    %744 = vmatprep.subr.bf16.mxu0 0
    %745 = vmatpush1.bf16.msra.mxu0 %v714
    %746 = vmatprep.subr.bf16.mxu0 0
    %747 = vmatpush2.bf16.msra.mxu0 0
    %748 = vmatprep.subr.bf16.mxu0 0
    %749 = vmatpush2.bf16.msra.mxu0 0
    %750 = vmatprep.subr.bf16.mxu0 0
    %751 = vmatpush2.bf16.msra.mxu0 0
    %752 = vmatprep.subr.bf16.mxu0 0
    %753 = vmatpush2.bf16.msra.mxu0 0
    %754 = vmatprep.subr.bf16.mxu0 0
    %755 = vmatpush2.bf16.msra.mxu0 0
    %756 = vmatprep.subr.bf16.mxu0 0
    %757 = vmatpush2.bf16.msra.mxu0 0
    %758 = vmatprep.subr.bf16.mxu0 0
    %759 = vmatpush2.bf16.msra.mxu0 0
    %760 = vmatprep.subr.bf16.mxu0 0
    %761 = vmatpush2.bf16.msra.mxu0 0
    %762 = vmatprep.mubr.bf16.mxu0 0
    %763 = vmatmul.mubr.bf16.gmra.mxu0 %v656
    %v764 = vpop.f32.mrf.mxu0
    %v765 = vadd.f32 %v680, %v764
    %v766 = vpop.f32.mrf.mxu0
    %v767 = vpop.f32.mrf.mxu0
    %v768 = vadd.f32 %v680, %v767
    %v769 = vpop.f32.mrf.mxu0
    %770 = vdwg.mxu0
    %v771 = vmax.f32 %v765, 0.0
    %v772 = vmax.f32 %v768, 0.0
    %v773 = vpack.c.bf16 %v772, %v771
    %s774 = scalar_lea.vmem [#allocation6], 128
    %v775 = vld [vmem:[%s774] sm:$0xf]
    %v776 = vld [vmem:[%s774 + $0x4] sm:$0xf]
    %v777 = vld [vmem:[%s774 + $0x8] sm:$0xf]
    %v778 = vld [vmem:[%s774 + $0xc] sm:$0xf]
    %v779 = vld [vmem:[%s774 + $0x10] sm:$0xf]
    %v780 = vld [vmem:[%s774 + $0x14] sm:$0xf]
    %v781 = vld [vmem:[%s774 + $0x18] sm:$0xf]
    %v782 = vld [vmem:[%s774 + $0x1c] sm:$0xf]
    %v783 = vld [vmem:[%s774 + $0x20] sm:$0xf]
    %v784 = vld [vmem:[%s774 + $0x24] sm:$0xf]
    %v785 = vld [vmem:[%s774 + $0x28] sm:$0xf]
    %v786 = vld [vmem:[%s774 + $0x2c] sm:$0xf]
    %v787 = vld [vmem:[%s774 + $0x30] sm:$0xf]
    %v788 = vld [vmem:[%s774 + $0x34] sm:$0xf]
    %v789 = vld [vmem:[%s774 + $0x38] sm:$0xf]
    %v790 = vld [vmem:[%s774 + $0x3c] sm:$0xf]
    %s791 = scalar_lea.vmem %s8, 2
    %v792 = vld [vmem:[%s791] sm:$0x1]
    %v794 = vlaneseq
    %v795 = vshrl.u32 %v794, 7
    %v796 = vsub.s32 0, %v795
    %v797 = vrot.slane %v792, %v796
    %v815 = vunpack.c.l.b16 %v775
    %v816 = vunpack.c.l.b16 %v776
    %v817 = vunpack.c.l.b16 %v777
    %v818 = vunpack.c.l.b16 %v778
    %v819 = vunpack.c.l.b16 %v779
    %v820 = vunpack.c.l.b16 %v780
    %v821 = vunpack.c.l.b16 %v781
    %v822 = vunpack.c.l.b16 %v782
    %v823 = vunpack.c.l.b16 %v783
    %v824 = vunpack.c.l.b16 %v784
    %v825 = vunpack.c.l.b16 %v785
    %v826 = vunpack.c.l.b16 %v786
    %v827 = vunpack.c.l.b16 %v787
    %v828 = vunpack.c.l.b16 %v788
    %v829 = vunpack.c.l.b16 %v789
    %v830 = vunpack.c.l.b16 %v790
    %v831 = vpack.c.b16 %v816, %v815
    %v832 = vpack.c.b16 %v818, %v817
    %v833 = vpack.c.b16 %v820, %v819
    %v834 = vpack.c.b16 %v822, %v821
    %v835 = vpack.c.b16 %v824, %v823
    %v836 = vpack.c.b16 %v826, %v825
    %v837 = vpack.c.b16 %v828, %v827
    %v838 = vpack.c.b16 %v830, %v829
    %847 = vmatprep.subr.bf16.mxu0 0
    %848 = vmatpush1.bf16.msra.mxu0 %v838
    %849 = vmatprep.subr.bf16.mxu0 0
    %850 = vmatpush1.bf16.msra.mxu0 %v837
    %851 = vmatprep.subr.bf16.mxu0 0
    %852 = vmatpush1.bf16.msra.mxu0 %v836
    %853 = vmatprep.subr.bf16.mxu0 0
    %854 = vmatpush1.bf16.msra.mxu0 %v835
    %855 = vmatprep.subr.bf16.mxu0 0
    %856 = vmatpush1.bf16.msra.mxu0 %v834
    %857 = vmatprep.subr.bf16.mxu0 0
    %858 = vmatpush1.bf16.msra.mxu0 %v833
    %859 = vmatprep.subr.bf16.mxu0 0
    %860 = vmatpush1.bf16.msra.mxu0 %v832
    %861 = vmatprep.subr.bf16.mxu0 0
    %862 = vmatpush1.bf16.msra.mxu0 %v831
    %863 = vmatprep.subr.bf16.mxu0 0
    %864 = vmatpush2.bf16.msra.mxu0 0
    %865 = vmatprep.subr.bf16.mxu0 0
    %866 = vmatpush2.bf16.msra.mxu0 0
    %867 = vmatprep.subr.bf16.mxu0 0
    %868 = vmatpush2.bf16.msra.mxu0 0
    %869 = vmatprep.subr.bf16.mxu0 0
    %870 = vmatpush2.bf16.msra.mxu0 0
    %871 = vmatprep.subr.bf16.mxu0 0
    %872 = vmatpush2.bf16.msra.mxu0 0
    %873 = vmatprep.subr.bf16.mxu0 0
    %874 = vmatpush2.bf16.msra.mxu0 0
    %875 = vmatprep.subr.bf16.mxu0 0
    %876 = vmatpush2.bf16.msra.mxu0 0
    %877 = vmatprep.subr.bf16.mxu0 0
    %878 = vmatpush2.bf16.msra.mxu0 0
    %879 = vmatprep.mubr.bf16.mxu0 0
    %880 = vmatmul.mubr.bf16.gmra.mxu0 %v773
    %v881 = vpop.f32.mrf.mxu0
    %v882 = vadd.f32 %v797, %v881
    %v883 = vpop.f32.mrf.mxu0
    %v884 = vpop.f32.mrf.mxu0
    %v885 = vadd.f32 %v797, %v884
    %v886 = vpop.f32.mrf.mxu0
    %887 = vdwg.mxu0
    %v888 = vmax.f32 %v882, 0.0
    %v889 = vmax.f32 %v885, 0.0
    %v890 = vld [vmem:[%s9] sm:$0x1]
    %v891 = vpack.c.bf16 %v623, %v622
    %v892 = vld [vmem:[%s10] sm:$0x3]
    %894 = vset.pattern.permute.xlu0 0
    %895 = vperm.xlu0 %894, %v892
    %v896 = vpop.permute.xlu0 %895
    %vm898 = vcmask 130048
    %v900 = vsel %vm898, %v890, 0
    %902 = vmatprep.subr.bf16.mxu0 0
    %903 = vmatpush1.bf16.msra.mxu0 0
    %904 = vmatprep.subr.bf16.mxu0 0
    %905 = vmatpush1.bf16.msra.mxu0 0
    %906 = vmatprep.subr.bf16.mxu0 0
    %907 = vmatpush1.bf16.msra.mxu0 0
    %908 = vmatprep.subr.bf16.mxu0 0
    %909 = vmatpush1.bf16.msra.mxu0 0
    %910 = vmatprep.subr.bf16.mxu0 0
    %911 = vmatpush1.bf16.msra.mxu0 0
    %912 = vmatprep.subr.bf16.mxu0 0
    %913 = vmatpush1.bf16.msra.mxu0 0
    %914 = vmatprep.subr.bf16.mxu0 0
    %915 = vmatpush1.bf16.msra.mxu0 0
    %916 = vmatprep.subr.bf16.mxu0 0
    %917 = vmatpush1.bf16.msra.mxu0 %v891
    %918 = vmatprep.subr.bf16.mxu0 0
    %919 = vmatpush2.bf16.msra.mxu0 0
    %920 = vmatprep.subr.bf16.mxu0 0
    %921 = vmatpush2.bf16.msra.mxu0 0
    %922 = vmatprep.subr.bf16.mxu0 0
    %923 = vmatpush2.bf16.msra.mxu0 0
    %924 = vmatprep.subr.bf16.mxu0 0
    %925 = vmatpush2.bf16.msra.mxu0 0
    %926 = vmatprep.subr.bf16.mxu0 0
    %927 = vmatpush2.bf16.msra.mxu0 0
    %928 = vmatprep.subr.bf16.mxu0 0
    %929 = vmatpush2.bf16.msra.mxu0 0
    %930 = vmatprep.subr.bf16.mxu0 0
    %931 = vmatpush2.bf16.msra.mxu0 0
    %932 = vmatprep.subr.bf16.mxu0 0
    %933 = vmatpush2.bf16.msra.mxu0 0
    %934 = vmatprep.mubr.bf16.mxu0 0
    %935 = vmatmul.mubr.bf16.gmra.mxu0 %v900
    %v936 = vpop.f32.mrf.mxu0
    %v937 = vadd.f32 %v896, %v936
    %v938 = vpop.f32.mrf.mxu0
    %v939 = vpop.f32.mrf.mxu0
    %v940 = vpop.f32.mrf.mxu0
    %941 = vdwg.mxu0
    %v942 = vld [vmem:[%s11] sm:$0x1]
    %v943 = vpack.c.bf16 %v357, %v356
    %v944 = vld [vmem:[%s12] sm:$0x3]
    %946 = vset.pattern.permute.xlu0 0
    %947 = vperm.xlu0 %946, %v944
    %v948 = vpop.permute.xlu0 %947
    %v951 = vsel %vm898, %v942, 0
    %953 = vmatprep.subr.bf16.mxu0 0
    %954 = vmatpush1.bf16.msra.mxu0 0
    %955 = vmatprep.subr.bf16.mxu0 0
    %956 = vmatpush1.bf16.msra.mxu0 0
    %957 = vmatprep.subr.bf16.mxu0 0
    %958 = vmatpush1.bf16.msra.mxu0 0
    %959 = vmatprep.subr.bf16.mxu0 0
    %960 = vmatpush1.bf16.msra.mxu0 0
    %961 = vmatprep.subr.bf16.mxu0 0
    %962 = vmatpush1.bf16.msra.mxu0 0
    %963 = vmatprep.subr.bf16.mxu0 0
    %964 = vmatpush1.bf16.msra.mxu0 0
    %965 = vmatprep.subr.bf16.mxu0 0
    %966 = vmatpush1.bf16.msra.mxu0 0
    %967 = vmatprep.subr.bf16.mxu0 0
    %968 = vmatpush1.bf16.msra.mxu0 %v943
    %969 = vmatprep.subr.bf16.mxu0 0
    %970 = vmatpush2.bf16.msra.mxu0 0
    %971 = vmatprep.subr.bf16.mxu0 0
    %972 = vmatpush2.bf16.msra.mxu0 0
    %973 = vmatprep.subr.bf16.mxu0 0
    %974 = vmatpush2.bf16.msra.mxu0 0
    %975 = vmatprep.subr.bf16.mxu0 0
    %976 = vmatpush2.bf16.msra.mxu0 0
    %977 = vmatprep.subr.bf16.mxu0 0
    %978 = vmatpush2.bf16.msra.mxu0 0
    %979 = vmatprep.subr.bf16.mxu0 0
    %980 = vmatpush2.bf16.msra.mxu0 0
    %981 = vmatprep.subr.bf16.mxu0 0
    %982 = vmatpush2.bf16.msra.mxu0 0
    %983 = vmatprep.subr.bf16.mxu0 0
    %984 = vmatpush2.bf16.msra.mxu0 0
    %985 = vmatprep.mubr.bf16.mxu0 0
    %986 = vmatmul.mubr.bf16.gmra.mxu0 %v951
    %v987 = vpop.f32.mrf.mxu0
    %v988 = vadd.f32 %v948, %v987
    %v989 = vpop.f32.mrf.mxu0
    %v990 = vpop.f32.mrf.mxu0
    %v991 = vpop.f32.mrf.mxu0
    %992 = vdwg.mxu0
    %v993 = vld [vmem:[%s13] sm:$0xf]
    %v994 = vld [vmem:[%s13 + $0x4] sm:$0xf]
    %v995 = vpack.c.bf16 %v889, %v888
    %v996 = vld [vmem:[%s14] sm:$0xff]
    %v997 = vld [vmem:[%s14 + $0x8] sm:$0xff]
    %999 = vset.pattern.permute.xlu0 0
    %1000 = vperm.xlu0 %999, %v996
    %v1001 = vpop.permute.xlu0 %1000
    %1004 = vset.pattern.permute.xlu0 0
    %1005 = vperm.xlu0 %1004, %v997
    %v1006 = vpop.permute.xlu0 %1005
    %v1010 = vunpack.c.l.b16 %v993
    %v1011 = vunpack.c.l.b16 %v994
    %v1012 = vpack.c.b16 %v1011, %v1010
    %v1014 = vsel %vm898, %v1012, 0
    %1016 = vmatprep.subr.bf16.mxu0 0
    %1017 = vmatpush1.bf16.msra.mxu0 0
    %1018 = vmatprep.subr.bf16.mxu0 0
    %1019 = vmatpush1.bf16.msra.mxu0 0
    %1020 = vmatprep.subr.bf16.mxu0 0
    %1021 = vmatpush1.bf16.msra.mxu0 0
    %1022 = vmatprep.subr.bf16.mxu0 0
    %1023 = vmatpush1.bf16.msra.mxu0 0
    %1024 = vmatprep.subr.bf16.mxu0 0
    %1025 = vmatpush1.bf16.msra.mxu0 0
    %1026 = vmatprep.subr.bf16.mxu0 0
    %1027 = vmatpush1.bf16.msra.mxu0 0
    %1028 = vmatprep.subr.bf16.mxu0 0
    %1029 = vmatpush1.bf16.msra.mxu0 0
    %1030 = vmatprep.subr.bf16.mxu0 0
    %1031 = vmatpush1.bf16.msra.mxu0 %v995
    %1032 = vmatprep.subr.bf16.mxu0 0
    %1033 = vmatpush2.bf16.msra.mxu0 0
    %1034 = vmatprep.subr.bf16.mxu0 0
    %1035 = vmatpush2.bf16.msra.mxu0 0
    %1036 = vmatprep.subr.bf16.mxu0 0
    %1037 = vmatpush2.bf16.msra.mxu0 0
    %1038 = vmatprep.subr.bf16.mxu0 0
    %1039 = vmatpush2.bf16.msra.mxu0 0
    %1040 = vmatprep.subr.bf16.mxu0 0
    %1041 = vmatpush2.bf16.msra.mxu0 0
    %1042 = vmatprep.subr.bf16.mxu0 0
    %1043 = vmatpush2.bf16.msra.mxu0 0
    %1044 = vmatprep.subr.bf16.mxu0 0
    %1045 = vmatpush2.bf16.msra.mxu0 0
    %1046 = vmatprep.subr.bf16.mxu0 0
    %1047 = vmatpush2.bf16.msra.mxu0 0
    %1048 = vmatprep.mubr.bf16.mxu0 0
    %1049 = vmatmul.mubr.bf16.gmra.mxu0 %v1014
    %v1050 = vpop.f32.mrf.mxu0
    %v1051 = vadd.f32 %v1001, %v1050
    %v1052 = vpop.f32.mrf.mxu0
    %v1053 = vpop.f32.mrf.mxu0
    %v1054 = vadd.f32 %v1006, %v1053
    %v1055 = vpop.f32.mrf.mxu0
    %1056 = vdwg.mxu0
    %v1057 = vpack.c.bf16 %v988, %v988
    %v1058 = vpack.c.bf16 %v937, %v937
    %v1059 = vpack.c.bf16 %v1054, %v1051
    %1060 = vxpose.xlu0.c.b16.start [1/8] %v1057, 128
    %1061 = vxpose.xlu0.c.b16.cont [2/8] 0, 128
    %1062 = vxpose.xlu0.c.b16.cont [3/8] 0, 128
    %1063 = vxpose.xlu0.c.b16.cont [4/8] 0, 128
    %1064 = vxpose.xlu0.c.b16.cont [5/8] 0, 128
    %1065 = vxpose.xlu0.c.b16.cont [6/8] 0, 128
    %1066 = vxpose.xlu0.c.b16.cont [7/8] 0, 128
    %1067 = vxpose.xlu0.c.b16.end [8/8] 0, 128
    %v1068 = vpop.trf.xlu0
    %v1069 = vpop.trf.xlu0
    %v1070 = vpop.trf.xlu0
    %v1071 = vpop.trf.xlu0
    %v1072 = vpop.trf.xlu0
    %v1073 = vpop.trf.xlu0
    %v1074 = vpop.trf.xlu0
    %v1075 = vpop.trf.xlu0
    %vm1076 = vcmask 15360
    %v1078 = vsel %vm1076, %v1068, 0
    %v1081 = vsel %vm1076, %v1069, 0
    %v1084 = vsel %vm1076, %v1070, 0
    %v1087 = vsel %vm1076, %v1071, 0
    %vm1089 = vcmask 1040384
    %v1091 = vsel %vm1089, %v1058, 0
    %1093 = vmatprep.subr.bf16.mxu0 0
    %1094 = vmatpush1.bf16.msra.mxu0 0
    %1095 = vmatprep.subr.bf16.mxu0 0
    %1096 = vmatpush1.bf16.msra.mxu0 0
    %1097 = vmatprep.subr.bf16.mxu0 0
    %1098 = vmatpush1.bf16.msra.mxu0 0
    %1099 = vmatprep.subr.bf16.mxu0 0
    %1100 = vmatpush1.bf16.msra.mxu0 0
    %1101 = vmatprep.subr.bf16.mxu0 0
    %1102 = vmatpush1.bf16.msra.mxu0 0
    %1103 = vmatprep.subr.bf16.mxu0 0
    %1104 = vmatpush1.bf16.msra.mxu0 0
    %1105 = vmatprep.subr.bf16.mxu0 0
    %1106 = vmatpush1.bf16.msra.mxu0 0
    %1107 = vmatprep.subr.bf16.mxu0 0
    %1108 = vmatpush1.bf16.msra.mxu0 %v1091
    %1109 = vmatprep.subr.bf16.mxu0 0
    %1110 = vmatpush2.bf16.msra.mxu0 0
    %1111 = vmatprep.subr.bf16.mxu0 0
    %1112 = vmatpush2.bf16.msra.mxu0 0
    %1113 = vmatprep.subr.bf16.mxu0 0
    %1114 = vmatpush2.bf16.msra.mxu0 0
    %1115 = vmatprep.subr.bf16.mxu0 0
    %1116 = vmatpush2.bf16.msra.mxu0 0
    %1117 = vmatprep.subr.bf16.mxu0 0
    %1118 = vmatpush2.bf16.msra.mxu0 0
    %1119 = vmatprep.subr.bf16.mxu0 0
    %1120 = vmatpush2.bf16.msra.mxu0 0
    %1121 = vmatprep.subr.bf16.mxu0 0
    %1122 = vmatpush2.bf16.msra.mxu0 0
    %1123 = vmatprep.subr.bf16.mxu0 0
    %1124 = vmatpush2.bf16.msra.mxu0 0
    %1125 = vmatprep.mubr.bf16.mxu0 0
    %1126 = vmatmul.mubr.bf16.gmra.mxu0 %v1078
    %v1127 = vpop.f32.mrf.mxu0
    %v1128 = vadd.f32 0.0, %v1127
    %v1129 = vpop.f32.mrf.mxu0
    %v1130 = vpop.f32.mrf.mxu0
    %v1131 = vadd.f32 0.0, %v1130
    %v1132 = vpop.f32.mrf.mxu0
    %1133 = vmatprep.mubr.bf16.mxu0 0
    %1134 = vmatmul.mubr.bf16.gmra.mxu0 %v1081
    %v1135 = vpop.f32.mrf.mxu0
    %v1136 = vadd.f32 0.0, %v1135
    %v1137 = vpop.f32.mrf.mxu0
    %v1138 = vpop.f32.mrf.mxu0
    %v1139 = vadd.f32 0.0, %v1138
    %v1140 = vpop.f32.mrf.mxu0
    %1141 = vmatprep.mubr.bf16.mxu0 0
    %1142 = vmatmul.mubr.bf16.gmra.mxu0 %v1084
    %v1143 = vpop.f32.mrf.mxu0
    %v1144 = vadd.f32 0.0, %v1143
    %v1145 = vpop.f32.mrf.mxu0
    %v1146 = vpop.f32.mrf.mxu0
    %v1147 = vadd.f32 0.0, %v1146
    %v1148 = vpop.f32.mrf.mxu0
    %1149 = vmatprep.mubr.bf16.mxu0 0
    %1150 = vmatmul.mubr.bf16.gmra.mxu0 %v1087
    %v1151 = vpop.f32.mrf.mxu0
    %v1152 = vadd.f32 0.0, %v1151
    %v1153 = vpop.f32.mrf.mxu0
    %v1154 = vpop.f32.mrf.mxu0
    %v1155 = vadd.f32 0.0, %v1154
    %v1156 = vpop.f32.mrf.mxu0
    %1157 = vdwg.mxu0
    %v1158 = vmul.f32 %v1128, 0.25
    %v1159 = vmul.f32 %v1131, 0.25
    %v1160 = vmul.f32 %v1136, 0.25
    %v1161 = vmul.f32 %v1139, 0.25
    %v1162 = vmul.f32 %v1144, 0.25
    %v1163 = vmul.f32 %v1147, 0.25
    %v1164 = vmul.f32 %v1152, 0.25
    %v1165 = vmul.f32 %v1155, 0.25
    %vm1166 = vcmask 523264
    %v1167 = vsel %vm1166, %v1158, -inf
    %1168 = vmax.xlane.f32.xlu0 %v1167
    %v1169 = vpop.xlane.xlu0 %1168
    %v1170 = vsel %vm1166, %v1159, -inf
    %1171 = vmax.xlane.f32.xlu0 %v1170
    %v1172 = vpop.xlane.xlu0 %1171
    %v1173 = vsel %vm1166, %v1160, -inf
    %1174 = vmax.xlane.f32.xlu0 %v1173
    %v1175 = vpop.xlane.xlu0 %1174
    %v1176 = vsel %vm1166, %v1161, -inf
    %1177 = vmax.xlane.f32.xlu0 %v1176
    %v1178 = vpop.xlane.xlu0 %1177
    %v1179 = vsel %vm1166, %v1162, -inf
    %1180 = vmax.xlane.f32.xlu0 %v1179
    %v1181 = vpop.xlane.xlu0 %1180
    %v1182 = vsel %vm1166, %v1163, -inf
    %1183 = vmax.xlane.f32.xlu0 %v1182
    %v1184 = vpop.xlane.xlu0 %1183
    %v1185 = vsel %vm1166, %v1164, -inf
    %1186 = vmax.xlane.f32.xlu0 %v1185
    %v1187 = vpop.xlane.xlu0 %1186
    %v1188 = vsel %vm1166, %v1165, -inf
    %1189 = vmax.xlane.f32.xlu0 %v1188
    %v1190 = vpop.xlane.xlu0 %1189
    %v1191 = vsub.f32 %v1158, %v1169
    %v1192 = vsub.f32 %v1159, %v1172
    %v1193 = vsub.f32 %v1160, %v1175
    %v1194 = vsub.f32 %v1161, %v1178
    %v1195 = vsub.f32 %v1162, %v1181
    %v1196 = vsub.f32 %v1163, %v1184
    %v1197 = vsub.f32 %v1164, %v1187
    %v1198 = vsub.f32 %v1165, %v1190
    %v1199 = vmul.f32 %v1191, 1.442695
    %v1200 = vpow.pop %v1199
    %v1201 = vmul.f32 %v1192, 1.442695
    %v1202 = vpow.pop %v1201
    %v1203 = vmul.f32 %v1193, 1.442695
    %v1204 = vpow.pop %v1203
    %v1205 = vmul.f32 %v1194, 1.442695
    %v1206 = vpow.pop %v1205
    %v1207 = vmul.f32 %v1195, 1.442695
    %v1208 = vpow.pop %v1207
    %v1209 = vmul.f32 %v1196, 1.442695
    %v1210 = vpow.pop %v1209
    %v1211 = vmul.f32 %v1197, 1.442695
    %v1212 = vpow.pop %v1211
    %v1213 = vmul.f32 %v1198, 1.442695
    %v1214 = vpow.pop %v1213
    %v1215 = vsel %vm1166, %v1200, 0.0
    %1216 = vadd.xlane.f32.xlu0 %v1215
    %v1217 = vpop.xlane.xlu0 %1216
    %v1218 = vsel %vm1166, %v1202, 0.0
    %1219 = vadd.xlane.f32.xlu0 %v1218
    %v1220 = vpop.xlane.xlu0 %1219
    %v1221 = vsel %vm1166, %v1204, 0.0
    %1222 = vadd.xlane.f32.xlu0 %v1221
    %v1223 = vpop.xlane.xlu0 %1222
    %v1224 = vsel %vm1166, %v1206, 0.0
    %1225 = vadd.xlane.f32.xlu0 %v1224
    %v1226 = vpop.xlane.xlu0 %1225
    %v1227 = vsel %vm1166, %v1208, 0.0
    %1228 = vadd.xlane.f32.xlu0 %v1227
    %v1229 = vpop.xlane.xlu0 %1228
    %v1230 = vsel %vm1166, %v1210, 0.0
    %1231 = vadd.xlane.f32.xlu0 %v1230
    %v1232 = vpop.xlane.xlu0 %1231
    %v1233 = vsel %vm1166, %v1212, 0.0
    %1234 = vadd.xlane.f32.xlu0 %v1233
    %v1235 = vpop.xlane.xlu0 %1234
    %v1236 = vsel %vm1166, %v1214, 0.0
    %1237 = vadd.xlane.f32.xlu0 %v1236
    %v1238 = vpop.xlane.xlu0 %1237
    %v1239 = vrcp.pop %v1217
    %v1240 = vrcp.pop %v1220
    %v1241 = vrcp.pop %v1223
    %v1242 = vrcp.pop %v1226
    %v1243 = vrcp.pop %v1229
    %v1244 = vrcp.pop %v1232
    %v1245 = vrcp.pop %v1235
    %v1246 = vrcp.pop %v1238
    %v1247 = vmul.f32 %v1200, %v1239
    %v1248 = vmul.f32 %v1202, %v1240
    %v1249 = vmul.f32 %v1204, %v1241
    %v1250 = vmul.f32 %v1206, %v1242
    %v1251 = vmul.f32 %v1208, %v1243
    %v1252 = vmul.f32 %v1210, %v1244
    %v1253 = vmul.f32 %v1212, %v1245
    %v1254 = vmul.f32 %v1214, %v1246
    %v1255 = vpack.c.bf16 %v1248, %v1247
    %v1256 = vpack.c.bf16 %v1250, %v1249
    %v1257 = vpack.c.bf16 %v1252, %v1251
    %v1258 = vpack.c.bf16 %v1254, %v1253
    %v1260 = vsel %vm1166, %v1059, 0
    %v1263 = vsel %vm1166, %v1255, 0
    %v1266 = vsel %vm1166, %v1256, 0
    %v1269 = vsel %vm1166, %v1257, 0
    %v1272 = vsel %vm1166, %v1258, 0
    %1274 = vmatprep.subr.bf16.mxu0 0
    %1275 = vmatpush1.bf16.xpose.msra.mxu0 0
    %1276 = vmatprep.subr.bf16.mxu0 0
    %1277 = vmatpush1.bf16.xpose.msra.mxu0 0
    %1278 = vmatprep.subr.bf16.mxu0 0
    %1279 = vmatpush1.bf16.xpose.msra.mxu0 0
    %1280 = vmatprep.subr.bf16.mxu0 0
    %1281 = vmatpush1.bf16.xpose.msra.mxu0 0
    %1282 = vmatprep.subr.bf16.mxu0 0
    %1283 = vmatpush1.bf16.xpose.msra.mxu0 %v1272
    %1284 = vmatprep.subr.bf16.mxu0 0
    %1285 = vmatpush1.bf16.xpose.msra.mxu0 %v1269
    %1286 = vmatprep.subr.bf16.mxu0 0
    %1287 = vmatpush1.bf16.xpose.msra.mxu0 %v1266
    %1288 = vmatprep.subr.bf16.mxu0 0
    %1289 = vmatpush1.bf16.xpose.msra.mxu0 %v1263
    %1290 = vmatprep.subr.bf16.mxu0 0
    %1291 = vmatpush2.bf16.xpose.msra.mxu0 0
    %1292 = vmatprep.subr.bf16.mxu0 0
    %1293 = vmatpush2.bf16.xpose.msra.mxu0 0
    %1294 = vmatprep.subr.bf16.mxu0 0
    %1295 = vmatpush2.bf16.xpose.msra.mxu0 0
    %1296 = vmatprep.subr.bf16.mxu0 0
    %1297 = vmatpush2.bf16.xpose.msra.mxu0 0
    %1298 = vmatprep.subr.bf16.mxu0 0
    %1299 = vmatpush2.bf16.xpose.msra.mxu0 0
    %1300 = vmatprep.subr.bf16.mxu0 0
    %1301 = vmatpush2.bf16.xpose.msra.mxu0 0
    %1302 = vmatprep.subr.bf16.mxu0 0
    %1303 = vmatpush2.bf16.xpose.msra.mxu0 0
    %1304 = vmatprep.subr.bf16.mxu0 0
    %1305 = vmatpush2.bf16.xpose.msra.mxu0 0
    %1306 = vmatprep.mubr.bf16.mxu0 0
    %1307 = vmatmul.mubr.bf16.gmra.mxu0 %v1260
    %v1308 = vpop.f32.mrf.mxu0
    %v1309 = vadd.f32 0.0, %v1308
    %v1310 = vpop.f32.mrf.mxu0
    %v1311 = vpop.f32.mrf.mxu0
    %v1312 = vadd.f32 0.0, %v1311
    %v1313 = vpop.f32.mrf.mxu0
    %1314 = vdwg.mxu0
    %v1315 = vpack.c.bf16 %v1312, %v1309
    %v1317 = vunpack.c.l.b16 %v1315
    %v1318 = vunpack.c.h.b16 %v1315
    %v1319 = vpack.c.b16 %v1317, %v1317
    %v1320 = vpack.c.b16 %v1318, %v1318
    %vm1323 = vcmask 519168
    %1324 = vst.msk [vmem:[#allocation2] sm:$0xf] %vm1323, %v1319
    %1325 = vst.msk [vmem:[#allocation2 + $0x4] sm:$0xf] %vm1323, %v1320
    %1327 = vrot.lane.b32.xlu0 %v1057, 64
    %v1328 = vpop.permute.xlu0 %1327
    %1330 = vxpose.xlu0.c.b16.start [1/8] %v1328, 128
    %1331 = vxpose.xlu0.c.b16.cont [2/8] 0, 128
    %1332 = vxpose.xlu0.c.b16.cont [3/8] 0, 128
    %1333 = vxpose.xlu0.c.b16.cont [4/8] 0, 128
    %1334 = vxpose.xlu0.c.b16.cont [5/8] 0, 128
    %1335 = vxpose.xlu0.c.b16.cont [6/8] 0, 128
    %1336 = vxpose.xlu0.c.b16.cont [7/8] 0, 128
    %1337 = vxpose.xlu0.c.b16.end [8/8] 0, 128
    %v1338 = vpop.trf.xlu0
    %v1339 = vpop.trf.xlu0
    %v1340 = vpop.trf.xlu0
    %v1341 = vpop.trf.xlu0
    %v1342 = vpop.trf.xlu0
    %v1343 = vpop.trf.xlu0
    %v1344 = vpop.trf.xlu0
    %v1345 = vpop.trf.xlu0
    %1347 = vrot.lane.b32.xlu0 %v1058, 64
    %v1348 = vpop.permute.xlu0 %1347
    %v1350 = vsel %vm1076, %v1338, 0
    %v1353 = vsel %vm1076, %v1339, 0
    %v1356 = vsel %vm1076, %v1340, 0
    %v1359 = vsel %vm1076, %v1341, 0
    %v1362 = vsel %vm1089, %v1348, 0
    %1364 = vmatprep.subr.bf16.mxu0 0
    %1365 = vmatpush1.bf16.msra.mxu0 0
    %1366 = vmatprep.subr.bf16.mxu0 0
    %1367 = vmatpush1.bf16.msra.mxu0 0
    %1368 = vmatprep.subr.bf16.mxu0 0
    %1369 = vmatpush1.bf16.msra.mxu0 0
    %1370 = vmatprep.subr.bf16.mxu0 0
    %1371 = vmatpush1.bf16.msra.mxu0 0
    %1372 = vmatprep.subr.bf16.mxu0 0
    %1373 = vmatpush1.bf16.msra.mxu0 0
    %1374 = vmatprep.subr.bf16.mxu0 0
    %1375 = vmatpush1.bf16.msra.mxu0 0
    %1376 = vmatprep.subr.bf16.mxu0 0
    %1377 = vmatpush1.bf16.msra.mxu0 0
    %1378 = vmatprep.subr.bf16.mxu0 0
    %1379 = vmatpush1.bf16.msra.mxu0 %v1362
    %1380 = vmatprep.subr.bf16.mxu0 0
    %1381 = vmatpush2.bf16.msra.mxu0 0
    %1382 = vmatprep.subr.bf16.mxu0 0
    %1383 = vmatpush2.bf16.msra.mxu0 0
    %1384 = vmatprep.subr.bf16.mxu0 0
    %1385 = vmatpush2.bf16.msra.mxu0 0
    %1386 = vmatprep.subr.bf16.mxu0 0
    %1387 = vmatpush2.bf16.msra.mxu0 0
    %1388 = vmatprep.subr.bf16.mxu0 0
    %1389 = vmatpush2.bf16.msra.mxu0 0
    %1390 = vmatprep.subr.bf16.mxu0 0
    %1391 = vmatpush2.bf16.msra.mxu0 0
    %1392 = vmatprep.subr.bf16.mxu0 0
    %1393 = vmatpush2.bf16.msra.mxu0 0
    %1394 = vmatprep.subr.bf16.mxu0 0
    %1395 = vmatpush2.bf16.msra.mxu0 0
    %1396 = vmatprep.mubr.bf16.mxu0 0
    %1397 = vmatmul.mubr.bf16.gmra.mxu0 %v1350
    %v1398 = vpop.f32.mrf.mxu0
    %v1399 = vadd.f32 0.0, %v1398
    %v1400 = vpop.f32.mrf.mxu0
    %v1401 = vpop.f32.mrf.mxu0
    %v1402 = vadd.f32 0.0, %v1401
    %v1403 = vpop.f32.mrf.mxu0
    %1404 = vmatprep.mubr.bf16.mxu0 0
    %1405 = vmatmul.mubr.bf16.gmra.mxu0 %v1353
    %v1406 = vpop.f32.mrf.mxu0
    %v1407 = vadd.f32 0.0, %v1406
    %v1408 = vpop.f32.mrf.mxu0
    %v1409 = vpop.f32.mrf.mxu0
    %v1410 = vadd.f32 0.0, %v1409
    %v1411 = vpop.f32.mrf.mxu0
    %1412 = vmatprep.mubr.bf16.mxu0 0
    %1413 = vmatmul.mubr.bf16.gmra.mxu0 %v1356
    %v1414 = vpop.f32.mrf.mxu0
    %v1415 = vadd.f32 0.0, %v1414
    %v1416 = vpop.f32.mrf.mxu0
    %v1417 = vpop.f32.mrf.mxu0
    %v1418 = vadd.f32 0.0, %v1417
    %v1419 = vpop.f32.mrf.mxu0
    %1420 = vmatprep.mubr.bf16.mxu0 0
    %1421 = vmatmul.mubr.bf16.gmra.mxu0 %v1359
    %v1422 = vpop.f32.mrf.mxu0
    %v1423 = vadd.f32 0.0, %v1422
    %v1424 = vpop.f32.mrf.mxu0
    %v1425 = vpop.f32.mrf.mxu0
    %v1426 = vadd.f32 0.0, %v1425
    %v1427 = vpop.f32.mrf.mxu0
    %1428 = vdwg.mxu0
    %v1429 = vmul.f32 %v1399, 0.25
    %v1430 = vmul.f32 %v1402, 0.25
    %v1431 = vmul.f32 %v1407, 0.25
    %v1432 = vmul.f32 %v1410, 0.25
    %v1433 = vmul.f32 %v1415, 0.25
    %v1434 = vmul.f32 %v1418, 0.25
    %v1435 = vmul.f32 %v1423, 0.25
    %v1436 = vmul.f32 %v1426, 0.25
    %v1437 = vsel %vm1166, %v1429, -inf
    %1438 = vmax.xlane.f32.xlu0 %v1437
    %v1439 = vpop.xlane.xlu0 %1438
    %v1440 = vsel %vm1166, %v1430, -inf
    %1441 = vmax.xlane.f32.xlu0 %v1440
    %v1442 = vpop.xlane.xlu0 %1441
    %v1443 = vsel %vm1166, %v1431, -inf
    %1444 = vmax.xlane.f32.xlu0 %v1443
    %v1445 = vpop.xlane.xlu0 %1444
    %v1446 = vsel %vm1166, %v1432, -inf
    %1447 = vmax.xlane.f32.xlu0 %v1446
    %v1448 = vpop.xlane.xlu0 %1447
    %v1449 = vsel %vm1166, %v1433, -inf
    %1450 = vmax.xlane.f32.xlu0 %v1449
    %v1451 = vpop.xlane.xlu0 %1450
    %v1452 = vsel %vm1166, %v1434, -inf
    %1453 = vmax.xlane.f32.xlu0 %v1452
    %v1454 = vpop.xlane.xlu0 %1453
    %v1455 = vsel %vm1166, %v1435, -inf
    %1456 = vmax.xlane.f32.xlu0 %v1455
    %v1457 = vpop.xlane.xlu0 %1456
    %v1458 = vsel %vm1166, %v1436, -inf
    %1459 = vmax.xlane.f32.xlu0 %v1458
    %v1460 = vpop.xlane.xlu0 %1459
    %v1461 = vsub.f32 %v1429, %v1439
    %v1462 = vsub.f32 %v1430, %v1442
    %v1463 = vsub.f32 %v1431, %v1445
    %v1464 = vsub.f32 %v1432, %v1448
    %v1465 = vsub.f32 %v1433, %v1451
    %v1466 = vsub.f32 %v1434, %v1454
    %v1467 = vsub.f32 %v1435, %v1457
    %v1468 = vsub.f32 %v1436, %v1460
    %v1469 = vmul.f32 %v1461, 1.442695
    %v1470 = vpow.pop %v1469
    %v1471 = vmul.f32 %v1462, 1.442695
    %v1472 = vpow.pop %v1471
    %v1473 = vmul.f32 %v1463, 1.442695
    %v1474 = vpow.pop %v1473
    %v1475 = vmul.f32 %v1464, 1.442695
    %v1476 = vpow.pop %v1475
    %v1477 = vmul.f32 %v1465, 1.442695
    %v1478 = vpow.pop %v1477
    %v1479 = vmul.f32 %v1466, 1.442695
    %v1480 = vpow.pop %v1479
    %v1481 = vmul.f32 %v1467, 1.442695
    %v1482 = vpow.pop %v1481
    %v1483 = vmul.f32 %v1468, 1.442695
    %v1484 = vpow.pop %v1483
    %v1485 = vsel %vm1166, %v1470, 0.0
    %1486 = vadd.xlane.f32.xlu0 %v1485
    %v1487 = vpop.xlane.xlu0 %1486
    %v1488 = vsel %vm1166, %v1472, 0.0
    %1489 = vadd.xlane.f32.xlu0 %v1488
    %v1490 = vpop.xlane.xlu0 %1489
    %v1491 = vsel %vm1166, %v1474, 0.0
    %1492 = vadd.xlane.f32.xlu0 %v1491
    %v1493 = vpop.xlane.xlu0 %1492
    %v1494 = vsel %vm1166, %v1476, 0.0
    %1495 = vadd.xlane.f32.xlu0 %v1494
    %v1496 = vpop.xlane.xlu0 %1495
    %v1497 = vsel %vm1166, %v1478, 0.0
    %1498 = vadd.xlane.f32.xlu0 %v1497
    %v1499 = vpop.xlane.xlu0 %1498
    %v1500 = vsel %vm1166, %v1480, 0.0
    %1501 = vadd.xlane.f32.xlu0 %v1500
    %v1502 = vpop.xlane.xlu0 %1501
    %v1503 = vsel %vm1166, %v1482, 0.0
    %1504 = vadd.xlane.f32.xlu0 %v1503
    %v1505 = vpop.xlane.xlu0 %1504
    %v1506 = vsel %vm1166, %v1484, 0.0
    %1507 = vadd.xlane.f32.xlu0 %v1506
    %v1508 = vpop.xlane.xlu0 %1507
    %v1509 = vrcp.pop %v1487
    %v1510 = vrcp.pop %v1490
    %v1511 = vrcp.pop %v1493
    %v1512 = vrcp.pop %v1496
    %v1513 = vrcp.pop %v1499
    %v1514 = vrcp.pop %v1502
    %v1515 = vrcp.pop %v1505
    %v1516 = vrcp.pop %v1508
    %v1517 = vmul.f32 %v1470, %v1509
    %v1518 = vmul.f32 %v1472, %v1510
    %v1519 = vmul.f32 %v1474, %v1511
    %v1520 = vmul.f32 %v1476, %v1512
    %v1521 = vmul.f32 %v1478, %v1513
    %v1522 = vmul.f32 %v1480, %v1514
    %v1523 = vmul.f32 %v1482, %v1515
    %v1524 = vmul.f32 %v1484, %v1516
    %v1525 = vpack.c.bf16 %v1518, %v1517
    %v1526 = vpack.c.bf16 %v1520, %v1519
    %v1527 = vpack.c.bf16 %v1522, %v1521
    %v1528 = vpack.c.bf16 %v1524, %v1523
    %1530 = vrot.lane.b32.xlu0 %v1059, 64
    %v1531 = vpop.permute.xlu0 %1530
    %v1533 = vsel %vm1166, %v1531, 0
    %v1536 = vsel %vm1166, %v1525, 0
    %v1539 = vsel %vm1166, %v1526, 0
    %v1542 = vsel %vm1166, %v1527, 0
    %v1545 = vsel %vm1166, %v1528, 0
    %1547 = vmatprep.subr.bf16.mxu0 0
    %1548 = vmatpush1.bf16.xpose.msra.mxu0 0
    %1549 = vmatprep.subr.bf16.mxu0 0
    %1550 = vmatpush1.bf16.xpose.msra.mxu0 0
    %1551 = vmatprep.subr.bf16.mxu0 0
    %1552 = vmatpush1.bf16.xpose.msra.mxu0 0
    %1553 = vmatprep.subr.bf16.mxu0 0
    %1554 = vmatpush1.bf16.xpose.msra.mxu0 0
    %1555 = vmatprep.subr.bf16.mxu0 0
    %1556 = vmatpush1.bf16.xpose.msra.mxu0 %v1545
    %1557 = vmatprep.subr.bf16.mxu0 0
    %1558 = vmatpush1.bf16.xpose.msra.mxu0 %v1542
    %1559 = vmatprep.subr.bf16.mxu0 0
    %1560 = vmatpush1.bf16.xpose.msra.mxu0 %v1539
    %1561 = vmatprep.subr.bf16.mxu0 0
    %1562 = vmatpush1.bf16.xpose.msra.mxu0 %v1536
    %1563 = vmatprep.subr.bf16.mxu0 0
    %1564 = vmatpush2.bf16.xpose.msra.mxu0 0
    %1565 = vmatprep.subr.bf16.mxu0 0
    %1566 = vmatpush2.bf16.xpose.msra.mxu0 0
    %1567 = vmatprep.subr.bf16.mxu0 0
    %1568 = vmatpush2.bf16.xpose.msra.mxu0 0
    %1569 = vmatprep.subr.bf16.mxu0 0
    %1570 = vmatpush2.bf16.xpose.msra.mxu0 0
    %1571 = vmatprep.subr.bf16.mxu0 0
    %1572 = vmatpush2.bf16.xpose.msra.mxu0 0
    %1573 = vmatprep.subr.bf16.mxu0 0
    %1574 = vmatpush2.bf16.xpose.msra.mxu0 0
    %1575 = vmatprep.subr.bf16.mxu0 0
    %1576 = vmatpush2.bf16.xpose.msra.mxu0 0
    %1577 = vmatprep.subr.bf16.mxu0 0
    %1578 = vmatpush2.bf16.xpose.msra.mxu0 0
    %1579 = vmatprep.mubr.bf16.mxu0 0
    %1580 = vmatmul.mubr.bf16.gmra.mxu0 %v1533
    %v1581 = vpop.f32.mrf.mxu0
    %v1582 = vadd.f32 0.0, %v1581
    %v1583 = vpop.f32.mrf.mxu0
    %v1584 = vpop.f32.mrf.mxu0
    %v1585 = vadd.f32 0.0, %v1584
    %v1586 = vpop.f32.mrf.mxu0
    %1587 = vdwg.mxu0
    %v1588 = vpack.c.bf16 %v1585, %v1582
    %v1590 = vunpack.c.l.b16 %v1588
    %v1591 = vunpack.c.h.b16 %v1588
    %v1592 = vpack.c.b16 %v1590, %v1590
    %v1593 = vpack.c.b16 %v1591, %v1591
    %1594 = vrot.lane.b32.xlu0 %v1592, 64
    %v1595 = vpop.permute.xlu0 %1594
    %1596 = vrot.lane.b32.xlu0 %v1593, 64
    %v1597 = vpop.permute.xlu0 %1596
    %vm1600 = vcmask 1043968
    %1601 = vst.msk [vmem:[#allocation2] sm:$0xf] %vm1600, %v1595
    %1602 = vst.msk [vmem:[#allocation2 + $0x4] sm:$0xf] %vm1600, %v1597
    %v1603 = vld [vmem:[%s15] sm:$0xf]
    %v1604 = vld [vmem:[%s15 + $0x4] sm:$0xf]
    %v1605 = vld [vmem:[%s2] sm:$0xff]
    %v1606 = vld [vmem:[%s2 + $0x8] sm:$0xff]
    %v1607 = vpack.c.bf16 %v1606, %v1605
    %v1608 = vld [vmem:[%s16] sm:$0xf]
    %v1609 = vld [vmem:[%s16 + $0x4] sm:$0xf]
    %v1610 = vld [vmem:[#allocation2] sm:$0xf]
    %v1611 = vld [vmem:[#allocation2 + $0x4] sm:$0xf]
    %v1614 = vunpack.c.l.b16 %v1608
    %v1615 = vunpack.c.l.b16 %v1609
    %v1616 = vpack.c.b16 %v1615, %v1614
    %v1619 = vunpack.c.l.b16 %v1610
    %v1620 = vunpack.c.l.b16 %v1611
    %v1621 = vpack.c.b16 %v1620, %v1619
    %v1624 = vsel %vm898, %v1616, 0
    %1626 = vmatprep.subr.bf16.mxu0 0
    %1627 = vmatpush1.bf16.msra.mxu0 0
    %1628 = vmatprep.subr.bf16.mxu0 0
    %1629 = vmatpush1.bf16.msra.mxu0 0
    %1630 = vmatprep.subr.bf16.mxu0 0
    %1631 = vmatpush1.bf16.msra.mxu0 0
    %1632 = vmatprep.subr.bf16.mxu0 0
    %1633 = vmatpush1.bf16.msra.mxu0 0
    %1634 = vmatprep.subr.bf16.mxu0 0
    %1635 = vmatpush1.bf16.msra.mxu0 0
    %1636 = vmatprep.subr.bf16.mxu0 0
    %1637 = vmatpush1.bf16.msra.mxu0 0
    %1638 = vmatprep.subr.bf16.mxu0 0
    %1639 = vmatpush1.bf16.msra.mxu0 0
    %1640 = vmatprep.subr.bf16.mxu0 0
    %1641 = vmatpush1.bf16.msra.mxu0 %v1621
    %1642 = vmatprep.subr.bf16.mxu0 0
    %1643 = vmatpush2.bf16.msra.mxu0 0
    %1644 = vmatprep.subr.bf16.mxu0 0
    %1645 = vmatpush2.bf16.msra.mxu0 0
    %1646 = vmatprep.subr.bf16.mxu0 0
    %1647 = vmatpush2.bf16.msra.mxu0 0
    %1648 = vmatprep.subr.bf16.mxu0 0
    %1649 = vmatpush2.bf16.msra.mxu0 0
    %1650 = vmatprep.subr.bf16.mxu0 0
    %1651 = vmatpush2.bf16.msra.mxu0 0
    %1652 = vmatprep.subr.bf16.mxu0 0
    %1653 = vmatpush2.bf16.msra.mxu0 0
    %1654 = vmatprep.subr.bf16.mxu0 0
    %1655 = vmatpush2.bf16.msra.mxu0 0
    %1656 = vmatprep.subr.bf16.mxu0 0
    %1657 = vmatpush2.bf16.msra.mxu0 0
    %1658 = vmatprep.mubr.bf16.mxu0 0
    %1659 = vmatmul.mubr.bf16.gmra.mxu0 %v1624
    %v1660 = vpop.f32.mrf.mxu0
    %v1661 = vadd.f32 0.0, %v1660
    %v1662 = vpop.f32.mrf.mxu0
    %v1663 = vpop.f32.mrf.mxu0
    %v1664 = vadd.f32 0.0, %v1663
    %v1665 = vpop.f32.mrf.mxu0
    %1666 = vdwg.mxu0
    %v1669 = vunpack.c.l.b16 %v1603
    %v1670 = vunpack.c.l.b16 %v1604
    %v1671 = vpack.c.b16 %v1670, %v1669
    %v1673 = vsel %vm898, %v1671, 0
    %1675 = vmatprep.subr.bf16.mxu0 0
    %1676 = vmatpush1.bf16.msra.mxu0 0
    %1677 = vmatprep.subr.bf16.mxu0 0
    %1678 = vmatpush1.bf16.msra.mxu0 0
    %1679 = vmatprep.subr.bf16.mxu0 0
    %1680 = vmatpush1.bf16.msra.mxu0 0
    %1681 = vmatprep.subr.bf16.mxu0 0
    %1682 = vmatpush1.bf16.msra.mxu0 0
    %1683 = vmatprep.subr.bf16.mxu0 0
    %1684 = vmatpush1.bf16.msra.mxu0 0
    %1685 = vmatprep.subr.bf16.mxu0 0
    %1686 = vmatpush1.bf16.msra.mxu0 0
    %1687 = vmatprep.subr.bf16.mxu0 0
    %1688 = vmatpush1.bf16.msra.mxu0 0
    %1689 = vmatprep.subr.bf16.mxu0 0
    %1690 = vmatpush1.bf16.msra.mxu0 %v1607
    %1691 = vmatprep.subr.bf16.mxu0 0
    %1692 = vmatpush2.bf16.msra.mxu0 0
    %1693 = vmatprep.subr.bf16.mxu0 0
    %1694 = vmatpush2.bf16.msra.mxu0 0
    %1695 = vmatprep.subr.bf16.mxu0 0
    %1696 = vmatpush2.bf16.msra.mxu0 0
    %1697 = vmatprep.subr.bf16.mxu0 0
    %1698 = vmatpush2.bf16.msra.mxu0 0
    %1699 = vmatprep.subr.bf16.mxu0 0
    %1700 = vmatpush2.bf16.msra.mxu0 0
    %1701 = vmatprep.subr.bf16.mxu0 0
    %1702 = vmatpush2.bf16.msra.mxu0 0
    %1703 = vmatprep.subr.bf16.mxu0 0
    %1704 = vmatpush2.bf16.msra.mxu0 0
    %1705 = vmatprep.subr.bf16.mxu0 0
    %1706 = vmatpush2.bf16.msra.mxu0 0
    %1707 = vmatprep.mubr.bf16.mxu0 0
    %1708 = vmatmul.mubr.bf16.gmra.mxu0 %v1673
    %v1709 = vpop.f32.mrf.mxu0
    %v1710 = vadd.f32 %v1661, %v1709
    %v1711 = vpop.f32.mrf.mxu0
    %v1712 = vpop.f32.mrf.mxu0
    %v1713 = vadd.f32 %v1664, %v1712
    %v1714 = vpop.f32.mrf.mxu0
    %1715 = vdwg.mxu0
    %v1716 = vld [vmem:[%s17] sm:$0xff]
    %v1717 = vld [vmem:[%s17 + $0x8] sm:$0xff]
    %1719 = vset.pattern.permute.xlu0 0
    %1720 = vperm.xlu0 %1719, %v1716
    %v1721 = vpop.permute.xlu0 %1720
    %1724 = vset.pattern.permute.xlu0 0
    %1725 = vperm.xlu0 %1724, %v1717
    %v1726 = vpop.permute.xlu0 %1725
    %v1728 = vadd.f32 %v1710, %v1721
    %v1729 = vadd.f32 %v1713, %v1726
    %s1730 = scalar_lea.vmem %s3, 48
    %v1731 = vld [vmem:[%s1730] sm:$0xff]
    %v1732 = vld [vmem:[%s1730 + $0x8] sm:$0xff]
    %1734 = vset.pattern.permute.xlu0 0
    %1735 = vperm.xlu0 %1734, %v1731
    %v1736 = vpop.permute.xlu0 %1735
    %1739 = vset.pattern.permute.xlu0 0
    %1740 = vperm.xlu0 %1739, %v1732
    %v1741 = vpop.permute.xlu0 %1740
    %v1743 = vmul.f32 %v1728, %v1736
    %v1744 = vmul.f32 %v1729, %v1741
    %s1745 = scalar_lea.vmem %s4, 48
    %v1746 = vld [vmem:[%s1745] sm:$0xff]
    %v1747 = vld [vmem:[%s1745 + $0x8] sm:$0xff]
    %1749 = vset.pattern.permute.xlu0 0
    %1750 = vperm.xlu0 %1749, %v1746
    %v1751 = vpop.permute.xlu0 %1750
    %1754 = vset.pattern.permute.xlu0 0
    %1755 = vperm.xlu0 %1754, %v1747
    %v1756 = vpop.permute.xlu0 %1755
    %v1758 = vadd.f32 %v1743, %v1751
    %v1759 = vadd.f32 %v1744, %v1756
    %v1760 = vpack.c.bf16 %v1759, %v1758
    %s1761 = scalar_lea.vmem [#allocation3], 192
    %v1762 = vld [vmem:[%s1761] sm:$0xf]
    %v1763 = vld [vmem:[%s1761 + $0x4] sm:$0xf]
    %v1764 = vld [vmem:[%s1761 + $0x8] sm:$0xf]
    %v1765 = vld [vmem:[%s1761 + $0xc] sm:$0xf]
    %v1766 = vld [vmem:[%s1761 + $0x10] sm:$0xf]
    %v1767 = vld [vmem:[%s1761 + $0x14] sm:$0xf]
    %v1768 = vld [vmem:[%s1761 + $0x18] sm:$0xf]
    %v1769 = vld [vmem:[%s1761 + $0x1c] sm:$0xf]
    %v1770 = vld [vmem:[%s1761 + $0x20] sm:$0xf]
    %v1771 = vld [vmem:[%s1761 + $0x24] sm:$0xf]
    %v1772 = vld [vmem:[%s1761 + $0x28] sm:$0xf]
    %v1773 = vld [vmem:[%s1761 + $0x2c] sm:$0xf]
    %v1774 = vld [vmem:[%s1761 + $0x30] sm:$0xf]
    %v1775 = vld [vmem:[%s1761 + $0x34] sm:$0xf]
    %v1776 = vld [vmem:[%s1761 + $0x38] sm:$0xf]
    %v1777 = vld [vmem:[%s1761 + $0x3c] sm:$0xf]
    %s1778 = scalar_lea.vmem %s6, 3
    %v1779 = vld [vmem:[%s1778] sm:$0x1]
    %v1781 = vlaneseq
    %v1782 = vshrl.u32 %v1781, 7
    %v1783 = vsub.s32 0, %v1782
    %v1784 = vrot.slane %v1779, %v1783
    %v1802 = vunpack.c.l.b16 %v1762
    %v1803 = vunpack.c.l.b16 %v1763
    %v1804 = vunpack.c.l.b16 %v1764
    %v1805 = vunpack.c.l.b16 %v1765
    %v1806 = vunpack.c.l.b16 %v1766
    %v1807 = vunpack.c.l.b16 %v1767
    %v1808 = vunpack.c.l.b16 %v1768
    %v1809 = vunpack.c.l.b16 %v1769
    %v1810 = vunpack.c.l.b16 %v1770
    %v1811 = vunpack.c.l.b16 %v1771
    %v1812 = vunpack.c.l.b16 %v1772
    %v1813 = vunpack.c.l.b16 %v1773
    %v1814 = vunpack.c.l.b16 %v1774
    %v1815 = vunpack.c.l.b16 %v1775
    %v1816 = vunpack.c.l.b16 %v1776
    %v1817 = vunpack.c.l.b16 %v1777
    %v1818 = vpack.c.b16 %v1803, %v1802
    %v1819 = vpack.c.b16 %v1805, %v1804
    %v1820 = vpack.c.b16 %v1807, %v1806
    %v1821 = vpack.c.b16 %v1809, %v1808
    %v1822 = vpack.c.b16 %v1811, %v1810
    %v1823 = vpack.c.b16 %v1813, %v1812
    %v1824 = vpack.c.b16 %v1815, %v1814
    %v1825 = vpack.c.b16 %v1817, %v1816
    %1834 = vmatprep.subr.bf16.mxu0 0
    %1835 = vmatpush1.bf16.msra.mxu0 %v1825
    %1836 = vmatprep.subr.bf16.mxu0 0
    %1837 = vmatpush1.bf16.msra.mxu0 %v1824
    %1838 = vmatprep.subr.bf16.mxu0 0
    %1839 = vmatpush1.bf16.msra.mxu0 %v1823
    %1840 = vmatprep.subr.bf16.mxu0 0
    %1841 = vmatpush1.bf16.msra.mxu0 %v1822
    %1842 = vmatprep.subr.bf16.mxu0 0
    %1843 = vmatpush1.bf16.msra.mxu0 %v1821
    %1844 = vmatprep.subr.bf16.mxu0 0
    %1845 = vmatpush1.bf16.msra.mxu0 %v1820
    %1846 = vmatprep.subr.bf16.mxu0 0
    %1847 = vmatpush1.bf16.msra.mxu0 %v1819
    %1848 = vmatprep.subr.bf16.mxu0 0
    %1849 = vmatpush1.bf16.msra.mxu0 %v1818
    %1850 = vmatprep.subr.bf16.mxu0 0
    %1851 = vmatpush2.bf16.msra.mxu0 0
    %1852 = vmatprep.subr.bf16.mxu0 0
    %1853 = vmatpush2.bf16.msra.mxu0 0
    %1854 = vmatprep.subr.bf16.mxu0 0
    %1855 = vmatpush2.bf16.msra.mxu0 0
    %1856 = vmatprep.subr.bf16.mxu0 0
    %1857 = vmatpush2.bf16.msra.mxu0 0
    %1858 = vmatprep.subr.bf16.mxu0 0
    %1859 = vmatpush2.bf16.msra.mxu0 0
    %1860 = vmatprep.subr.bf16.mxu0 0
    %1861 = vmatpush2.bf16.msra.mxu0 0
    %1862 = vmatprep.subr.bf16.mxu0 0
    %1863 = vmatpush2.bf16.msra.mxu0 0
    %1864 = vmatprep.subr.bf16.mxu0 0
    %1865 = vmatpush2.bf16.msra.mxu0 0
    %1866 = vmatprep.mubr.bf16.mxu0 0
    %1867 = vmatmul.mubr.bf16.gmra.mxu0 %v1760
    %v1868 = vpop.f32.mrf.mxu0
    %v1869 = vadd.f32 %v1784, %v1868
    %v1870 = vpop.f32.mrf.mxu0
    %v1871 = vpop.f32.mrf.mxu0
    %v1872 = vadd.f32 %v1784, %v1871
    %v1873 = vpop.f32.mrf.mxu0
    %1874 = vdwg.mxu0
    %v1875 = vmax.f32 %v1869, 0.0
    %v1876 = vmax.f32 %v1872, 0.0
    %v1877 = vpack.c.bf16 %v1876, %v1875
    %s1878 = scalar_lea.vmem [#allocation6], 192
    %v1879 = vld [vmem:[%s1878] sm:$0xf]
    %v1880 = vld [vmem:[%s1878 + $0x4] sm:$0xf]
    %v1881 = vld [vmem:[%s1878 + $0x8] sm:$0xf]
    %v1882 = vld [vmem:[%s1878 + $0xc] sm:$0xf]
    %v1883 = vld [vmem:[%s1878 + $0x10] sm:$0xf]
    %v1884 = vld [vmem:[%s1878 + $0x14] sm:$0xf]
    %v1885 = vld [vmem:[%s1878 + $0x18] sm:$0xf]
    %v1886 = vld [vmem:[%s1878 + $0x1c] sm:$0xf]
    %v1887 = vld [vmem:[%s1878 + $0x20] sm:$0xf]
    %v1888 = vld [vmem:[%s1878 + $0x24] sm:$0xf]
    %v1889 = vld [vmem:[%s1878 + $0x28] sm:$0xf]
    %v1890 = vld [vmem:[%s1878 + $0x2c] sm:$0xf]
    %v1891 = vld [vmem:[%s1878 + $0x30] sm:$0xf]
    %v1892 = vld [vmem:[%s1878 + $0x34] sm:$0xf]
    %v1893 = vld [vmem:[%s1878 + $0x38] sm:$0xf]
    %v1894 = vld [vmem:[%s1878 + $0x3c] sm:$0xf]
    %s1895 = scalar_lea.vmem %s8, 3
    %v1896 = vld [vmem:[%s1895] sm:$0x1]
    %v1898 = vlaneseq
    %v1899 = vshrl.u32 %v1898, 7
    %v1900 = vsub.s32 0, %v1899
    %v1901 = vrot.slane %v1896, %v1900
    %v1919 = vunpack.c.l.b16 %v1879
    %v1920 = vunpack.c.l.b16 %v1880
    %v1921 = vunpack.c.l.b16 %v1881
    %v1922 = vunpack.c.l.b16 %v1882
    %v1923 = vunpack.c.l.b16 %v1883
    %v1924 = vunpack.c.l.b16 %v1884
    %v1925 = vunpack.c.l.b16 %v1885
    %v1926 = vunpack.c.l.b16 %v1886
    %v1927 = vunpack.c.l.b16 %v1887
    %v1928 = vunpack.c.l.b16 %v1888
    %v1929 = vunpack.c.l.b16 %v1889
    %v1930 = vunpack.c.l.b16 %v1890
    %v1931 = vunpack.c.l.b16 %v1891
    %v1932 = vunpack.c.l.b16 %v1892
    %v1933 = vunpack.c.l.b16 %v1893
    %v1934 = vunpack.c.l.b16 %v1894
    %v1935 = vpack.c.b16 %v1920, %v1919
    %v1936 = vpack.c.b16 %v1922, %v1921
    %v1937 = vpack.c.b16 %v1924, %v1923
    %v1938 = vpack.c.b16 %v1926, %v1925
    %v1939 = vpack.c.b16 %v1928, %v1927
    %v1940 = vpack.c.b16 %v1930, %v1929
    %v1941 = vpack.c.b16 %v1932, %v1931
    %v1942 = vpack.c.b16 %v1934, %v1933
    %1951 = vmatprep.subr.bf16.mxu0 0
    %1952 = vmatpush1.bf16.msra.mxu0 %v1942
    %1953 = vmatprep.subr.bf16.mxu0 0
    %1954 = vmatpush1.bf16.msra.mxu0 %v1941
    %1955 = vmatprep.subr.bf16.mxu0 0
    %1956 = vmatpush1.bf16.msra.mxu0 %v1940
    %1957 = vmatprep.subr.bf16.mxu0 0
    %1958 = vmatpush1.bf16.msra.mxu0 %v1939
    %1959 = vmatprep.subr.bf16.mxu0 0
    %1960 = vmatpush1.bf16.msra.mxu0 %v1938
    %1961 = vmatprep.subr.bf16.mxu0 0
    %1962 = vmatpush1.bf16.msra.mxu0 %v1937
    %1963 = vmatprep.subr.bf16.mxu0 0
    %1964 = vmatpush1.bf16.msra.mxu0 %v1936
    %1965 = vmatprep.subr.bf16.mxu0 0
    %1966 = vmatpush1.bf16.msra.mxu0 %v1935
    %1967 = vmatprep.subr.bf16.mxu0 0
    %1968 = vmatpush2.bf16.msra.mxu0 0
    %1969 = vmatprep.subr.bf16.mxu0 0
    %1970 = vmatpush2.bf16.msra.mxu0 0
    %1971 = vmatprep.subr.bf16.mxu0 0
    %1972 = vmatpush2.bf16.msra.mxu0 0
    %1973 = vmatprep.subr.bf16.mxu0 0
    %1974 = vmatpush2.bf16.msra.mxu0 0
    %1975 = vmatprep.subr.bf16.mxu0 0
    %1976 = vmatpush2.bf16.msra.mxu0 0
    %1977 = vmatprep.subr.bf16.mxu0 0
    %1978 = vmatpush2.bf16.msra.mxu0 0
    %1979 = vmatprep.subr.bf16.mxu0 0
    %1980 = vmatpush2.bf16.msra.mxu0 0
    %1981 = vmatprep.subr.bf16.mxu0 0
    %1982 = vmatpush2.bf16.msra.mxu0 0
    %1983 = vmatprep.mubr.bf16.mxu0 0
    %1984 = vmatmul.mubr.bf16.gmra.mxu0 %v1877
    %v1985 = vpop.f32.mrf.mxu0
    %v1986 = vadd.f32 %v1901, %v1985
    %v1987 = vpop.f32.mrf.mxu0
    %v1988 = vpop.f32.mrf.mxu0
    %v1989 = vadd.f32 %v1901, %v1988
    %v1990 = vpop.f32.mrf.mxu0
    %1991 = vdwg.mxu0
    %v1992 = vmax.f32 %v1986, 0.0
    %v1993 = vmax.f32 %v1989, 0.0
    %v1994 = vld [vmem:[%s18] sm:$0xf]
    %v1995 = vld [vmem:[%s18 + $0x4] sm:$0xf]
    %v1996 = vpack.c.bf16 %v1993, %v1992
    %v1997 = vld [vmem:[%s19] sm:$0xf]
    %v1998 = vld [vmem:[%s19 + $0x4] sm:$0xf]
    %v2001 = vunpack.c.l.b16 %v1997
    %v2002 = vunpack.c.l.b16 %v1998
    %v2003 = vpack.c.b16 %v2002, %v2001
    %v2005 = vsel %vm898, %v2003, 0
    %2007 = vmatprep.subr.bf16.mxu0 0
    %2008 = vmatpush1.bf16.msra.mxu0 0
    %2009 = vmatprep.subr.bf16.mxu0 0
    %2010 = vmatpush1.bf16.msra.mxu0 0
    %2011 = vmatprep.subr.bf16.mxu0 0
    %2012 = vmatpush1.bf16.msra.mxu0 0
    %2013 = vmatprep.subr.bf16.mxu0 0
    %2014 = vmatpush1.bf16.msra.mxu0 0
    %2015 = vmatprep.subr.bf16.mxu0 0
    %2016 = vmatpush1.bf16.msra.mxu0 0
    %2017 = vmatprep.subr.bf16.mxu0 0
    %2018 = vmatpush1.bf16.msra.mxu0 0
    %2019 = vmatprep.subr.bf16.mxu0 0
    %2020 = vmatpush1.bf16.msra.mxu0 0
    %2021 = vmatprep.subr.bf16.mxu0 0
    %2022 = vmatpush1.bf16.msra.mxu0 %v1621
    %2023 = vmatprep.subr.bf16.mxu0 0
    %2024 = vmatpush2.bf16.msra.mxu0 0
    %2025 = vmatprep.subr.bf16.mxu0 0
    %2026 = vmatpush2.bf16.msra.mxu0 0
    %2027 = vmatprep.subr.bf16.mxu0 0
    %2028 = vmatpush2.bf16.msra.mxu0 0
    %2029 = vmatprep.subr.bf16.mxu0 0
    %2030 = vmatpush2.bf16.msra.mxu0 0
    %2031 = vmatprep.subr.bf16.mxu0 0
    %2032 = vmatpush2.bf16.msra.mxu0 0
    %2033 = vmatprep.subr.bf16.mxu0 0
    %2034 = vmatpush2.bf16.msra.mxu0 0
    %2035 = vmatprep.subr.bf16.mxu0 0
    %2036 = vmatpush2.bf16.msra.mxu0 0
    %2037 = vmatprep.subr.bf16.mxu0 0
    %2038 = vmatpush2.bf16.msra.mxu0 0
    %2039 = vmatprep.mubr.bf16.mxu0 0
    %2040 = vmatmul.mubr.bf16.gmra.mxu0 %v2005
    %v2041 = vpop.f32.mrf.mxu0
    %v2042 = vadd.f32 0.0, %v2041
    %v2043 = vpop.f32.mrf.mxu0
    %v2044 = vpop.f32.mrf.mxu0
    %v2045 = vadd.f32 0.0, %v2044
    %v2046 = vpop.f32.mrf.mxu0
    %2047 = vdwg.mxu0
    %v2050 = vunpack.c.l.b16 %v1994
    %v2051 = vunpack.c.l.b16 %v1995
    %v2052 = vpack.c.b16 %v2051, %v2050
    %v2054 = vsel %vm898, %v2052, 0
    %2056 = vmatprep.subr.bf16.mxu0 0
    %2057 = vmatpush1.bf16.msra.mxu0 0
    %2058 = vmatprep.subr.bf16.mxu0 0
    %2059 = vmatpush1.bf16.msra.mxu0 0
    %2060 = vmatprep.subr.bf16.mxu0 0
    %2061 = vmatpush1.bf16.msra.mxu0 0
    %2062 = vmatprep.subr.bf16.mxu0 0
    %2063 = vmatpush1.bf16.msra.mxu0 0
    %2064 = vmatprep.subr.bf16.mxu0 0
    %2065 = vmatpush1.bf16.msra.mxu0 0
    %2066 = vmatprep.subr.bf16.mxu0 0
    %2067 = vmatpush1.bf16.msra.mxu0 0
    %2068 = vmatprep.subr.bf16.mxu0 0
    %2069 = vmatpush1.bf16.msra.mxu0 0
    %2070 = vmatprep.subr.bf16.mxu0 0
    %2071 = vmatpush1.bf16.msra.mxu0 %v1996
    %2072 = vmatprep.subr.bf16.mxu0 0
    %2073 = vmatpush2.bf16.msra.mxu0 0
    %2074 = vmatprep.subr.bf16.mxu0 0
    %2075 = vmatpush2.bf16.msra.mxu0 0
    %2076 = vmatprep.subr.bf16.mxu0 0
    %2077 = vmatpush2.bf16.msra.mxu0 0
    %2078 = vmatprep.subr.bf16.mxu0 0
    %2079 = vmatpush2.bf16.msra.mxu0 0
    %2080 = vmatprep.subr.bf16.mxu0 0
    %2081 = vmatpush2.bf16.msra.mxu0 0
    %2082 = vmatprep.subr.bf16.mxu0 0
    %2083 = vmatpush2.bf16.msra.mxu0 0
    %2084 = vmatprep.subr.bf16.mxu0 0
    %2085 = vmatpush2.bf16.msra.mxu0 0
    %2086 = vmatprep.subr.bf16.mxu0 0
    %2087 = vmatpush2.bf16.msra.mxu0 0
    %2088 = vmatprep.mubr.bf16.mxu0 0
    %2089 = vmatmul.mubr.bf16.gmra.mxu0 %v2054
    %v2090 = vpop.f32.mrf.mxu0
    %v2091 = vadd.f32 %v2042, %v2090
    %v2092 = vpop.f32.mrf.mxu0
    %v2093 = vpop.f32.mrf.mxu0
    %v2094 = vadd.f32 %v2045, %v2093
    %v2095 = vpop.f32.mrf.mxu0
    %2096 = vdwg.mxu0
    %v2097 = vld [vmem:[%s20] sm:$0xff]
    %v2098 = vld [vmem:[%s20 + $0x8] sm:$0xff]
    %2100 = vset.pattern.permute.xlu0 0
    %2101 = vperm.xlu0 %2100, %v2097
    %v2102 = vpop.permute.xlu0 %2101
    %2105 = vset.pattern.permute.xlu0 0
    %2106 = vperm.xlu0 %2105, %v2098
    %v2107 = vpop.permute.xlu0 %2106
    %v2109 = vadd.f32 %v2091, %v2102
    %v2110 = vadd.f32 %v2094, %v2107
    %2111 = vst [vmem:[#allocation8] sm:$0xff] %v2109
    %2112 = vst [vmem:[#allocation8 + $0x8] sm:$0xff] %v2110
    // Predicated region
    $region94: #{tpu_custom_call.1} parent=1 // pred_check
      _
    $region95: #{tpu_custom_call.1} parent=1 // pred_check_branch
      %2114 = sbr.rel (0) target = $region97
    $region96: #{tpu_custom_call.1} parent=1 // pred_region
      %s2116 = ssub.s32 256, 256
      %2117 = vsyncadd [#allocation5], %s2116
      %s2118 = sshll.u32 [#allocation8], 4
      %s2119 = int_to_ptr.vmem [resolvable:$true] %s2118
      %2124 = dma.vmem_to_hbm [thread:$0]  %s2119, 256, %s21, [#allocation5], 128, 128, 8
    $region97: #{tpu_custom_call.1} parent=1 // pred_fallthru
      _
    // Predicated region
    $region98: #{tpu_custom_call.1} parent=1 // pred_check
      _
    $region99: #{tpu_custom_call.1} parent=1 // pred_check_branch
      %2126 = sbr.rel (0) target = $region101
    $region100: #{tpu_custom_call.1} parent=1 // pred_region
      %2127 = dma.done [#allocation5], 256
    $region101: #{tpu_custom_call.1} parent=1 // pred_fallthru
      _
    %2128 = vsyncpa [#allocation4], 1
    %2129 = vsyncpa [#allocation7], 1
    %2130 = vsyncpa [#allocation5], 1

</llo_original>
